<compile_context>
chip_gen: v6e
topology: v6e:2x2x1
jax: 0.10.0
libtpu: 0.0.40
codegen_flags: <defaults>
</compile_context>

<pallas_src>
import functools
import math

import jax
import jax.numpy as jnp
from jax.experimental import pallas as pl
from jax.experimental.pallas import tpu as pltpu


def _fused_kernel(x_ref, lap_ref, w1_ref, scale1_ref, shift1_ref, w2_ref,
                  b2_ref, o_ref, *, K, mxu_dtype):
    # x_ref     : [p, Vp, Bblk*Cin]        (pool window leading, batch in lanes)
    # lap_ref   : [Vp, Vp]
    # w1_ref    : [K*Bblk*Cin,  Bblk*Cmid] (block-diag expanded over batch)
    # scale1/shift1 : [1, Bblk*Cmid]       (conv1 bias + eval-BN folded affine)
    # w2_ref    : [K*Bblk*Cmid, Bblk*Cout]
    # b2_ref    : [1, Bblk*Cout]
    # o_ref     : [Vp, Bblk*Cout]
    f32 = jnp.float32

    # ---- max-pool over the leading window axis: (p-1) lane-dense VPU maxes ----
    x0 = jnp.max(x_ref[...].astype(f32), axis=0)            # [Vp, Bblk*Cin]

    lap_m = lap_ref[...].astype(mxu_dtype)                   # [Vp, Vp]

    def cheb(t0, w_ref):
        # Chebyshev recursion (f32 state, MXU operands in mxu_dtype) followed by
        # ONE fused projection matmul over the concatenated orders.
        terms = [t0]
        if K > 1:
            t1 = jnp.dot(lap_m, t0.astype(mxu_dtype), preferred_element_type=f32)
            terms.append(t1)
            tm2, tm1 = t0, t1
            for _ in range(2, K):
                t2 = 2.0 * jnp.dot(lap_m, tm1.astype(mxu_dtype),
                                   preferred_element_type=f32) - tm2
                terms.append(t2)
                tm2, tm1 = tm1, t2
        tcat = jnp.concatenate(terms, axis=-1).astype(mxu_dtype)   # [Vp, K*L]
        return jnp.dot(tcat, w_ref[...], preferred_element_type=f32)

    # ---- conv1 -> (bias1 + BatchNorm) affine -> ReLU (all f32, VPU) ----
    y = cheb(x0, w1_ref)                                     # [Vp, Bblk*Cmid]
    y = y * scale1_ref[...] + shift1_ref[...]
    y = jnp.maximum(y, 0.0)

    # ---- conv2 + bias2, lane-dense store ----
    z = cheb(y, w2_ref) + b2_ref[...]                        # [Vp, Bblk*Cout]
    o_ref[...] = z.astype(o_ref.dtype)


def spherical_cheb_bn_pool_cheb(x, lap, w1, b1, bn_gamma, bn_beta, bn_mean,
                                bn_var, w2, b2, pool_size, *, eps=1e-5,
                                mxu_dtype=jnp.float32, batch_block=None):
    """x: [B, V, Cin] -> [B, V // pool_size, Cout]."""
    B, V, Cin = x.shape
    K, Cin_w, Cmid = w1.shape
    K2, Cmid_w, Cout = w2.shape
    assert Cin == Cin_w and K == K2 and Cmid == Cmid_w
    assert V % pool_size == 0
    Vp = V // pool_size
    assert lap.shape == (Vp, Vp)
    f32 = jnp.float32

    # ---- fold batch into lanes so the Chebyshev-state lane width is >= 128 ----
    if batch_block is None:
        batch_block = max(1, -(-128 // Cin))          # ceil(128 / Cin)
    Bblk = min(B, batch_block)
    Bpad = -(-B // Bblk) * Bblk
    xp = x
    if Bpad != B:
        xp = jnp.concatenate([x, jnp.zeros((Bpad - B, V, Cin), x.dtype)], axis=0)
    Bb = Bpad // Bblk

    # [B, V, Cin] -> [Bb, p, Vp, Bblk*Cin]  (layout plumbing only)
    x5 = xp.reshape(Bb, Bblk, Vp, pool_size, Cin)
    x5 = jnp.transpose(x5, (0, 3, 2, 1, 4))           # [Bb, p, Vp, Bblk, Cin]
    x4 = x5.reshape(Bb, pool_size, Vp, Bblk * Cin)

    # ---- block-diagonal-expanded weights: one fused matmul per conv ----
    eyeB = jnp.eye(Bblk, dtype=f32)
    w1_big = jnp.einsum('kio,bc->kbico', w1.astype(f32), eyeB)
    w1_big = w1_big.reshape(K * Bblk * Cin, Bblk * Cmid).astype(mxu_dtype)
    w2_big = jnp.einsum('kio,bc->kbico', w2.astype(f32), eyeB)
    w2_big = w2_big.reshape(K * Bblk * Cmid, Bblk * Cout).astype(mxu_dtype)

    # ---- fold conv1 bias + inference-mode BatchNorm into per-channel affine ----
    inv_std = 1.0 / jnp.sqrt(bn_var.astype(f32) + eps)
    scale = bn_gamma.astype(f32) * inv_std                                  # [Cmid]
    shift = bn_beta.astype(f32) + (b1.astype(f32) - bn_mean.astype(f32)) * scale
    scale_row = jnp.tile(scale, (Bblk,)).reshape(1, Bblk * Cmid)
    shift_row = jnp.tile(shift, (Bblk,)).reshape(1, Bblk * Cmid)
    b2_row = jnp.tile(b2.astype(f32), (Bblk,)).reshape(1, Bblk * Cout)

    lap_in = lap.astype(mxu_dtype)      # bf16 halves the resident lap footprint

    # ---- explicit scoped-VMEM budget (review item) ----
    def nbytes(shape, dtype):
        return math.prod(shape) * jnp.dtype(dtype).itemsize

    needed = (2 * nbytes((pool_size, Vp, Bblk * Cin), x4.dtype)
              + 2 * nbytes((Vp, Bblk * Cout), f32)
              + 2 * nbytes((Vp, Vp), mxu_dtype)
              + 2 * nbytes((K * Bblk * Cin, Bblk * Cmid), mxu_dtype)
              + 2 * nbytes((K * Bblk * Cmid, Bblk * Cout), mxu_dtype)
              + 8 * nbytes((1, Bblk * max(Cmid, Cout)), f32))
    vmem_limit = int(min(max(4 * needed, 32 * 1024 * 1024), 56 * 1024 * 1024))

    kernel = functools.partial(_fused_kernel, K=K, mxu_dtype=mxu_dtype)
    out = pl.pallas_call(
        kernel,
        out_shape=jax.ShapeDtypeStruct((Bb, Vp, Bblk * Cout), f32),
        grid=(Bb,),
        in_specs=[
            pl.BlockSpec((None, pool_size, Vp, Bblk * Cin),
                         lambda i: (i, 0, 0, 0)),
            pl.BlockSpec((Vp, Vp), lambda i: (0, 0)),
            pl.BlockSpec((K * Bblk * Cin, Bblk * Cmid), lambda i: (0, 0)),
            pl.BlockSpec((1, Bblk * Cmid), lambda i: (0, 0)),
            pl.BlockSpec((1, Bblk * Cmid), lambda i: (0, 0)),
            pl.BlockSpec((K * Bblk * Cmid, Bblk * Cout), lambda i: (0, 0)),
            pl.BlockSpec((1, Bblk * Cout), lambda i: (0, 0)),
        ],
        out_specs=pl.BlockSpec((None, Vp, Bblk * Cout), lambda i: (i, 0, 0)),
        compiler_params=pltpu.CompilerParams(
            dimension_semantics=("parallel",),
            vmem_limit_bytes=vmem_limit),
    )(x4, lap_in, w1_big, scale_row, shift_row, w2_big, b2_row)

    # [Bb, Vp, Bblk*Cout] -> [B, Vp, Cout]
    out = out.reshape(Bb, Vp, Bblk, Cout)
    out = jnp.transpose(out, (0, 2, 1, 3)).reshape(Bpad, Vp, Cout)
    return out[:B].astype(x.dtype)


def _reference(x, lap, w1, b1, gamma, beta, mean, var, w2, b2, p, eps=1e-5):
    """Pure-JAX reference of the module forward (pool->cheb->BN->ReLU->cheb)."""
    B, V, Cin = x.shape
    Vp = V // p
    hp = jax.lax.Precision.HIGHEST

    def cheb(t, w, b):
        K = w.shape[0]
        t0 = t
        out = jnp.einsum('bvf,fo->bvo', t0, w[0], precision=hp)
        if K > 1:
            t1 = jnp.einsum('uv,bvf->buf', lap, t0, precision=hp)
            out = out + jnp.einsum('bvf,fo->bvo', t1, w[1], precision=hp)
            for k in range(2, K):
                t2 = 2.0 * jnp.einsum('uv,bvf->buf', lap, t1, precision=hp) - t0
                out = out + jnp.einsum('bvf,fo->bvo', t2, w[k], precision=hp)
                t0, t1 = t1, t2
        return out + b

    xp = x.reshape(B, Vp, p, Cin).max(axis=2)
    y = cheb(xp, w1, b1)
    y = (y - mean) / jnp.sqrt(var + eps) * gamma + beta
    y = jnp.maximum(y, 0.0)
    return cheb(y, w2, b2)


if __name__ == "__main__":
    # Small shapes consistent with the module: vertices=64, pool=4 -> Vp=16,
    # in=8, middle=16, out=16, Chebyshev order K=3.  batch=32 so the lane-batching
    # (Bblk=16) yields two substantive parallel grid steps.
    B, V, Cin, Cmid, Cout, K, p = 32, 64, 8, 16, 16, 3, 4
    Vp = V // p

    key = jax.random.PRNGKey(0)
    kx, kw1, kw2, kg, kb, km, kv = jax.random.split(key, 7)
    x = jax.random.normal(kx, (B, V, Cin), dtype=jnp.float32)

    # Deterministic "laplacian" on the pooled graph: ring graph, symmetric
    # normalized, rescaled to approx [-1, 1]  (L_scaled = L - I, lmax ~= 2).
    idx = jnp.arange(Vp)
    A = (jnp.zeros((Vp, Vp))
         .at[idx, (idx + 1) % Vp].set(1.0)
         .at[idx, (idx - 1) % Vp].set(1.0))
    deg = A.sum(axis=1)
    Dm12 = jnp.diag(1.0 / jnp.sqrt(deg))
    L = jnp.eye(Vp) - Dm12 @ A @ Dm12
    lap = (L - jnp.eye(Vp)).astype(jnp.float32)

    # ChebConv params (kaiming-style) + BatchNorm affine & running stats.
    std1 = math.sqrt(2.0 / (Cin * K))
    std2 = math.sqrt(2.0 / (Cmid * K))
    w1 = (std1 * jax.random.normal(kw1, (K, Cin, Cmid))).astype(jnp.float32)
    w2 = (std2 * jax.random.normal(kw2, (K, Cmid, Cout))).astype(jnp.float32)
    b1 = jnp.full((Cmid,), 0.01, dtype=jnp.float32)
    b2 = jnp.full((Cout,), 0.01, dtype=jnp.float32)
    gamma = 1.0 + 0.1 * jax.random.normal(kg, (Cmid,), dtype=jnp.float32)
    beta = 0.1 * jax.random.normal(kb, (Cmid,), dtype=jnp.float32)
    mean = 0.1 * jax.random.normal(km, (Cmid,), dtype=jnp.float32)
    var = jax.random.uniform(kv, (Cmid,), minval=0.5, maxval=1.5,
                             dtype=jnp.float32)

    ref = _reference(x, lap, w1, b1, gamma, beta, mean, var, w2, b2, p)

    # f32 MXU operands (exact path).
    out = spherical_cheb_bn_pool_cheb(x, lap, w1, b1, gamma, beta, mean, var,
                                      w2, b2, p, mxu_dtype=jnp.float32)
    out = jax.block_until_ready(out)
    assert out.shape == (B, Vp, Cout)
    assert jnp.allclose(out, ref, atol=2e-3, rtol=2e-3)

    # bf16 MXU operands (full-rate MXU on v6e/v7x), f32 accumulation — verified
    # with a looser (relative-norm) tolerance per the review's precision note.
    out_bf16 = spherical_cheb_bn_pool_cheb(x, lap, w1, b1, gamma, beta, mean,
                                           var, w2, b2, p,
                                           mxu_dtype=jnp.bfloat16)
    out_bf16 = jax.block_until_ready(out_bf16)
    rel = jnp.linalg.norm(out_bf16 - ref) / jnp.linalg.norm(ref)
    assert float(rel) < 0.08

    print("KERNEL_OK")
</pallas_src>

<mosaic_0001>
module attributes {stable_mosaic.version = 11 : i64} {
  func.func @_fused_kernel(%arg0: i32, %arg1: memref<1x4x16x128xf32, #tpu.memory_space<vmem>>, %arg2: memref<16x16xf32, #tpu.memory_space<vmem>>, %arg3: memref<384x256xf32, #tpu.memory_space<vmem>>, %arg4: memref<1x256xf32, #tpu.memory_space<vmem>>, %arg5: memref<1x256xf32, #tpu.memory_space<vmem>>, %arg6: memref<768x256xf32, #tpu.memory_space<vmem>>, %arg7: memref<1x256xf32, #tpu.memory_space<vmem>>, %arg8: memref<1x16x256xf32, #tpu.memory_space<vmem>>) attributes {dimension_semantics = [#tpu.dimension_semantics<parallel>], iteration_bounds = array<i64: 2>, scalar_prefetch = 0 : i64, scratch_operands = 0 : i64, tpu.core_type = #tpu.core_type<tc>, window_params = [{transform_indices = @transform_0, window_bounds = array<i64: 1, 4, 16, 128>}, {pipeline_mode = #tpu.pipeline_mode<synchronous>, transform_indices = @transform_1, window_bounds = array<i64: 16, 16>}, {pipeline_mode = #tpu.pipeline_mode<synchronous>, transform_indices = @transform_2, window_bounds = array<i64: 384, 256>}, {pipeline_mode = #tpu.pipeline_mode<synchronous>, transform_indices = @transform_3, window_bounds = array<i64: 1, 256>}, {pipeline_mode = #tpu.pipeline_mode<synchronous>, transform_indices = @transform_4, window_bounds = array<i64: 1, 256>}, {pipeline_mode = #tpu.pipeline_mode<synchronous>, transform_indices = @transform_5, window_bounds = array<i64: 768, 256>}, {pipeline_mode = #tpu.pipeline_mode<synchronous>, transform_indices = @transform_6, window_bounds = array<i64: 1, 256>}, {transform_indices = @transform_7, window_bounds = array<i64: 1, 16, 256>}]} {
    %c0 = arith.constant 0 : index
    %c0_0 = arith.constant 0 : index
    %c0_1 = arith.constant 0 : index
    %c0_2 = arith.constant 0 : index
    %0 = vector.load %arg1[%c0, %c0_0, %c0_1, %c0_2] : memref<1x4x16x128xf32, #tpu.memory_space<vmem>>, vector<1x4x16x128xf32>
    %1 = vector.shape_cast %0 : vector<1x4x16x128xf32> to vector<4x16x128xf32>
    %cst = arith.constant dense<0xFF800000> : vector<16x128xf32>
    %2 = vector.multi_reduction <maximumf>, %1, %cst [0] : vector<4x16x128xf32> to vector<16x128xf32>
    %c0_3 = arith.constant 0 : index
    %c0_4 = arith.constant 0 : index
    %3 = vector.load %arg2[%c0_3, %c0_4] : memref<16x16xf32, #tpu.memory_space<vmem>>, vector<16x16xf32>
    %cst_5 = arith.constant dense<0.000000e+00> : vector<16x128xf32>
    %4 = tpu.matmul %3, %2, %cst_5 {dimension_numbers = #tpu.dot_dimension_numbers<[1], [0], [0], [1], [0, 0, 1, 1], [], []>} : vector<16x16xf32>, vector<16x128xf32>, vector<16x128xf32> -> vector<16x128xf32>
    %cst_6 = arith.constant dense<0.000000e+00> : vector<16x128xf32>
    %5 = tpu.matmul %3, %4, %cst_6 {dimension_numbers = #tpu.dot_dimension_numbers<[1], [0], [0], [1], [0, 0, 1, 1], [], []>} : vector<16x16xf32>, vector<16x128xf32>, vector<16x128xf32> -> vector<16x128xf32>
    %cst_7 = arith.constant 2.000000e+00 : f32
    %6 = vector.broadcast %cst_7 : f32 to vector<16x128xf32>
    %7 = arith.mulf %6, %5 : vector<16x128xf32>
    %8 = arith.subf %7, %2 : vector<16x128xf32>
    %9 = tpu.concatenate %2, %4, %8 in 1 : vector<16x128xf32>, vector<16x128xf32>, vector<16x128xf32> -> vector<16x384xf32>
    %c0_8 = arith.constant 0 : index
    %c0_9 = arith.constant 0 : index
    %10 = vector.load %arg3[%c0_8, %c0_9] : memref<384x256xf32, #tpu.memory_space<vmem>>, vector<384x256xf32>
    %cst_10 = arith.constant dense<0.000000e+00> : vector<16x256xf32>
    %11 = tpu.matmul %9, %10, %cst_10 {dimension_numbers = #tpu.dot_dimension_numbers<[1], [0], [0], [1], [0, 0, 1, 1], [], []>} : vector<16x384xf32>, vector<384x256xf32>, vector<16x256xf32> -> vector<16x256xf32>
    %c0_11 = arith.constant 0 : index
    %c0_12 = arith.constant 0 : index
    %12 = vector.load %arg4[%c0_11, %c0_12] : memref<1x256xf32, #tpu.memory_space<vmem>>, vector<1x256xf32>
    %13 = vector.broadcast %12 : vector<1x256xf32> to vector<16x256xf32>
    %14 = arith.mulf %11, %13 : vector<16x256xf32>
    %c0_13 = arith.constant 0 : index
    %c0_14 = arith.constant 0 : index
    %15 = vector.load %arg5[%c0_13, %c0_14] : memref<1x256xf32, #tpu.memory_space<vmem>>, vector<1x256xf32>
    %16 = vector.broadcast %15 : vector<1x256xf32> to vector<16x256xf32>
    %17 = arith.addf %14, %16 : vector<16x256xf32>
    %cst_15 = arith.constant 0.000000e+00 : f32
    %18 = vector.broadcast %cst_15 : f32 to vector<16x256xf32>
    %19 = arith.maximumf %17, %18 : vector<16x256xf32>
    %cst_16 = arith.constant dense<0.000000e+00> : vector<16x256xf32>
    %20 = tpu.matmul %3, %19, %cst_16 {dimension_numbers = #tpu.dot_dimension_numbers<[1], [0], [0], [1], [0, 0, 1, 1], [], []>} : vector<16x16xf32>, vector<16x256xf32>, vector<16x256xf32> -> vector<16x256xf32>
    %cst_17 = arith.constant dense<0.000000e+00> : vector<16x256xf32>
    %21 = tpu.matmul %3, %20, %cst_17 {dimension_numbers = #tpu.dot_dimension_numbers<[1], [0], [0], [1], [0, 0, 1, 1], [], []>} : vector<16x16xf32>, vector<16x256xf32>, vector<16x256xf32> -> vector<16x256xf32>
    %cst_18 = arith.constant 2.000000e+00 : f32
    %22 = vector.broadcast %cst_18 : f32 to vector<16x256xf32>
    %23 = arith.mulf %22, %21 : vector<16x256xf32>
    %24 = arith.subf %23, %19 : vector<16x256xf32>
    %25 = tpu.concatenate %19, %20, %24 in 1 : vector<16x256xf32>, vector<16x256xf32>, vector<16x256xf32> -> vector<16x768xf32>
    %c0_19 = arith.constant 0 : index
    %c0_20 = arith.constant 0 : index
    %26 = vector.load %arg6[%c0_19, %c0_20] : memref<768x256xf32, #tpu.memory_space<vmem>>, vector<768x256xf32>
    %cst_21 = arith.constant dense<0.000000e+00> : vector<16x256xf32>
    %27 = tpu.matmul %25, %26, %cst_21 {dimension_numbers = #tpu.dot_dimension_numbers<[1], [0], [0], [1], [0, 0, 1, 1], [], []>} : vector<16x768xf32>, vector<768x256xf32>, vector<16x256xf32> -> vector<16x256xf32>
    %c0_22 = arith.constant 0 : index
    %c0_23 = arith.constant 0 : index
    %28 = vector.load %arg7[%c0_22, %c0_23] : memref<1x256xf32, #tpu.memory_space<vmem>>, vector<1x256xf32>
    %29 = vector.broadcast %28 : vector<1x256xf32> to vector<16x256xf32>
    %30 = arith.addf %27, %29 : vector<16x256xf32>
    %c0_24 = arith.constant 0 : index
    %c0_25 = arith.constant 0 : index
    %c0_26 = arith.constant 0 : index
    %31 = vector.load %arg8[%c0_24, %c0_25, %c0_26] : memref<1x16x256xf32, #tpu.memory_space<vmem>>, vector<1x16x256xf32>
    %32 = vector.shape_cast %31 : vector<1x16x256xf32> to vector<16x256xf32>
    %33 = vector.shape_cast %30 : vector<16x256xf32> to vector<1x16x256xf32>
    tpu.vector_store %arg8[%c0_24, %c0_25, %c0_26], %33 {strides = array<i32>} : memref<1x16x256xf32, #tpu.memory_space<vmem>>, vector<1x16x256xf32>,
    return
  }
  func.func @transform_0(%arg0: i32) -> (i32, i32, i32, i32) {
    %c0_i32 = arith.constant 0 : i32
    %c0_i32_0 = arith.constant 0 : i32
    %c0_i32_1 = arith.constant 0 : i32
    %c0_i32_2 = arith.constant 0 : i32
    return %arg0, %c0_i32, %c0_i32_0, %c0_i32_1 : i32, i32, i32, i32
  }
  func.func @transform_1(%arg0: i32) -> (i32, i32) {
    %c0_i32 = arith.constant 0 : i32
    %c0_i32_0 = arith.constant 0 : i32
    %c0_i32_1 = arith.constant 0 : i32
    return %c0_i32, %c0_i32_0 : i32, i32
  }
  func.func @transform_2(%arg0: i32) -> (i32, i32) {
    %c0_i32 = arith.constant 0 : i32
    %c0_i32_0 = arith.constant 0 : i32
    %c0_i32_1 = arith.constant 0 : i32
    return %c0_i32, %c0_i32_0 : i32, i32
  }
  func.func @transform_3(%arg0: i32) -> (i32, i32) {
    %c0_i32 = arith.constant 0 : i32
    %c0_i32_0 = arith.constant 0 : i32
    %c0_i32_1 = arith.constant 0 : i32
    return %c0_i32, %c0_i32_0 : i32, i32
  }
  func.func @transform_4(%arg0: i32) -> (i32, i32) {
    %c0_i32 = arith.constant 0 : i32
    %c0_i32_0 = arith.constant 0 : i32
    %c0_i32_1 = arith.constant 0 : i32
    return %c0_i32, %c0_i32_0 : i32, i32
  }
  func.func @transform_5(%arg0: i32) -> (i32, i32) {
    %c0_i32 = arith.constant 0 : i32
    %c0_i32_0 = arith.constant 0 : i32
    %c0_i32_1 = arith.constant 0 : i32
    return %c0_i32, %c0_i32_0 : i32, i32
  }
  func.func @transform_6(%arg0: i32) -> (i32, i32) {
    %c0_i32 = arith.constant 0 : i32
    %c0_i32_0 = arith.constant 0 : i32
    %c0_i32_1 = arith.constant 0 : i32
    return %c0_i32, %c0_i32_0 : i32, i32
  }
  func.func @transform_7(%arg0: i32) -> (i32, i32, i32) {
    %c0_i32 = arith.constant 0 : i32
    %c0_i32_0 = arith.constant 0 : i32
    %c0_i32_1 = arith.constant 0 : i32
    return %arg0, %c0_i32, %c0_i32_0 : i32, i32, i32
  }
}

</mosaic_0001>

<llo_original>
// kernel: tpu_custom_call.1
$region0: #{tpu_custom_call.1}
  #allocation0 [shape = 'u32[]', space=smem, size = 0x4, offset = 0x4, fixed_abs, tag = 'smem constant byte address 0x4 - core index']
  #allocation1 [shape = 'u32[144,128]{1,0:T(1,128)}', space=vmem, size = 0x12000, scoped, tag = 'internal scratch']
  %s0 = inlined_call_operand.hbm [shape: f32[2,4,16,128], index: 0, kind: input, shape index: {}]
  %s1 = inlined_call_operand.hbm [shape: f32[16,16], index: 1, kind: input, shape index: {}]
  %s2 = inlined_call_operand.hbm [shape: f32[384,256], index: 2, kind: input, shape index: {}]
  %s3 = inlined_call_operand.vmem [shape: f32[1,256], index: 3, kind: input, shape index: {}]
  %s4 = inlined_call_operand.vmem [shape: f32[1,256], index: 4, kind: input, shape index: {}]
  %s5 = inlined_call_operand.hbm [shape: f32[768,256], index: 5, kind: input, shape index: {}]
  %s6 = inlined_call_operand.vmem [shape: f32[1,256], index: 6, kind: input, shape index: {}]
  %s7 = inlined_call_operand.hbm [shape: f32[2,16,256], index: 7, kind: output, shape index: {}]
  %s8 = sld [smem:[#allocation0]]
  $region77: #{tpu_custom_call.1} parent=0
    _
  %s10 = ssub.s32 1, %s8
  %s11 = scalar_select 0, %s10, %s8
  $region1: #{tpu_custom_call.1} parent=0
    #allocation2 [shape = 'u8[65536]{0}', space=vmem, size = 0x10000, scoped, tag = 'input window, operand 0']
    #allocation3 [shape = 's32[2]{0}', space=sflag, size = 0x8, scoped, tag = 'scoped memory for tpu_custom_call.1']
    #allocation4 [shape = 's32[2]{0}', space=sflag, size = 0x8, scoped, tag = 'scoped memory for tpu_custom_call.1']
    #allocation5 [shape = 'u8[8192]{0}', space=vmem, size = 0x2000, scoped, tag = 'input window, operand 1, single buffered']
    #allocation6 [shape = 's32[1]{0}', space=sflag, size = 0x4, scoped, tag = 'scoped memory for tpu_custom_call.1']
    #allocation7 [shape = 'u8[393216]{0}', space=vmem, size = 0x60000, scoped, tag = 'input window, operand 2, single buffered']
    #allocation8 [shape = 'u8[786432]{0}', space=vmem, size = 0xc0000, scoped, tag = 'input window, operand 5, single buffered']
    #allocation9 [shape = 's32[1]{0}', space=sflag, size = 0x4, scoped, tag = 'scoped memory for tpu_custom_call.1']
    #allocation10 [shape = 'u8[32768]{0}', space=vmem, size = 0x8000, scoped, tag = 'output window, operand 0']
    %12 = vsyncpa [#allocation3], 0
    %s13 = scalar_lea.sflag [#allocation3], 1
    %14 = vsyncpa %s13, 0
    %15 = vsyncpa [#allocation6], 0
    %16 = vsyncpa [#allocation9], 0
    %17 = vsyncpa [#allocation4], 0
    %s18 = scalar_lea.sflag [#allocation4], 1
    %19 = vsyncpa %s18, 0
    loop: start=0, step=1, limit=4
    $region2: #{tpu_custom_call.1} parent=1 // loop_pre_header
      _
    $region3: #{tpu_custom_call.1} parent=1 // loop_header
      %s21 = sphi 0, %s25
      %p22 = scmp.ge.s32.totalorder %s21, 4
      %s31 = sphi 0, %s33
      %s34 = sphi 0, %s31
      %s35 = sphi 0, %s34
      %s51 = sphi 0, %s35
      %s55 = sphi 0, %s55
      %s57 = sphi 0, %s55
      %s58 = sphi 0, %s57
      %s72 = sphi 0, %s58
      %s76 = sphi 0, %s76
      %s78 = sphi 0, %s76
      %s79 = sphi 0, %s78
      %s93 = sphi 0, %s79
      %s97 = sphi 0, %s97
      %s99 = sphi 0, %s97
      %s100 = sphi 0, %s99
      %s114 = sphi 0, %s100
      %s118 = sphi 0, %s118
      %s120 = sphi 0, %s118
      %s121 = sphi 0, %s120
      %s135 = sphi 0, %s121
      %s139 = sphi 0, %s139
      %s141 = sphi 0, %s139
      %s142 = sphi 0, %s141
      %s156 = sphi 0, %s142
      %s160 = sphi 0, %s160
      %s162 = sphi 0, %s160
      %s163 = sphi 0, %s162
      %s177 = sphi 0, %s163
      %s183 = sphi 0, %s185
      %s186 = sphi 0, %s183
      %s187 = sphi 0, %s186
      %s203 = sphi 0, %s187
    $region4: #{tpu_custom_call.1} parent=1 // loop_header_branch
      %24 = sbr.rel (%p22) target = $region8
    $region5: #{tpu_custom_call.1} parent=1 // loop_body
      %s26 = ssub.s32 %s21, 1
      %s27 = ssub.s32 %s21, 2
      %s28 = sadd.s32 %s21, 1
      %s29 = ssub.s32 %s21, %s28
      %p30 = scmp.eq.s32.totalorder %s29, 0
      %s32 = sadd.s32 %s31, 1
      %s33 = scalar_select %p30, %s31, %s32
      %p36 = pneg %p30
      %p37 = scmp.eq.s32.totalorder %s21, 1
      %p38 = por %p36, %p37
      %p39 = scmp.ne.s32.totalorder %s31, %s34
      %p40 = scmp.eq.s32.totalorder %s21, 0
      %p41 = por %p39, %p40
      %p42 = scmp.ne.s32.totalorder %s31, %s34
      %p43 = scmp.eq.s32.totalorder %s26, 1
      %p44 = por %p42, %p43
      %p45 = scmp.ne.s32.totalorder %s34, %s35
      %p46 = scmp.eq.s32.totalorder %s26, 0
      %p47 = por %p45, %p46
      %p48 = scmp.ne.s32.totalorder %s34, %s35
      %p49 = scmp.eq.s32.totalorder %s27, 1
      %p50 = por %p48, %p49
      %p52 = scmp.ne.s32.totalorder %s35, %s51
      %p53 = scmp.eq.s32.totalorder %s27, 0
      %p54 = por %p52, %p53
      %s56 = sadd.s32 %s55, 1
      %p59 = scmp.eq.s32.totalorder %s21, 1
      %p60 = scmp.ne.s32.totalorder %s55, %s57
      %p61 = scmp.eq.s32.totalorder %s21, 0
      %p62 = por %p60, %p61
      %p63 = scmp.ne.s32.totalorder %s55, %s57
      %p64 = scmp.eq.s32.totalorder %s26, 1
      %p65 = por %p63, %p64
      %p66 = scmp.ne.s32.totalorder %s57, %s58
      %p67 = scmp.eq.s32.totalorder %s26, 0
      %p68 = por %p66, %p67
      %p69 = scmp.ne.s32.totalorder %s57, %s58
      %p70 = scmp.eq.s32.totalorder %s27, 1
      %p71 = por %p69, %p70
      %p73 = scmp.ne.s32.totalorder %s58, %s72
      %p74 = scmp.eq.s32.totalorder %s27, 0
      %p75 = por %p73, %p74
      %s77 = sadd.s32 %s76, 1
      %p80 = scmp.eq.s32.totalorder %s21, 1
      %p81 = scmp.ne.s32.totalorder %s76, %s78
      %p82 = scmp.eq.s32.totalorder %s21, 0
      %p83 = por %p81, %p82
      %p84 = scmp.ne.s32.totalorder %s76, %s78
      %p85 = scmp.eq.s32.totalorder %s26, 1
      %p86 = por %p84, %p85
      %p87 = scmp.ne.s32.totalorder %s78, %s79
      %p88 = scmp.eq.s32.totalorder %s26, 0
      %p89 = por %p87, %p88
      %p90 = scmp.ne.s32.totalorder %s78, %s79
      %p91 = scmp.eq.s32.totalorder %s27, 1
      %p92 = por %p90, %p91
      %p94 = scmp.ne.s32.totalorder %s79, %s93
      %p95 = scmp.eq.s32.totalorder %s27, 0
      %p96 = por %p94, %p95
      %s98 = sadd.s32 %s97, 1
      %p101 = scmp.eq.s32.totalorder %s21, 1
      %p102 = scmp.ne.s32.totalorder %s97, %s99
      %p103 = scmp.eq.s32.totalorder %s21, 0
      %p104 = por %p102, %p103
      %p105 = scmp.ne.s32.totalorder %s97, %s99
      %p106 = scmp.eq.s32.totalorder %s26, 1
      %p107 = por %p105, %p106
      %p108 = scmp.ne.s32.totalorder %s99, %s100
      %p109 = scmp.eq.s32.totalorder %s26, 0
      %p110 = por %p108, %p109
      %p111 = scmp.ne.s32.totalorder %s99, %s100
      %p112 = scmp.eq.s32.totalorder %s27, 1
      %p113 = por %p111, %p112
      %p115 = scmp.ne.s32.totalorder %s100, %s114
      %p116 = scmp.eq.s32.totalorder %s27, 0
      %p117 = por %p115, %p116
      %s119 = sadd.s32 %s118, 1
      %p122 = scmp.eq.s32.totalorder %s21, 1
      %p123 = scmp.ne.s32.totalorder %s118, %s120
      %p124 = scmp.eq.s32.totalorder %s21, 0
      %p125 = por %p123, %p124
      %p126 = scmp.ne.s32.totalorder %s118, %s120
      %p127 = scmp.eq.s32.totalorder %s26, 1
      %p128 = por %p126, %p127
      %p129 = scmp.ne.s32.totalorder %s120, %s121
      %p130 = scmp.eq.s32.totalorder %s26, 0
      %p131 = por %p129, %p130
      %p132 = scmp.ne.s32.totalorder %s120, %s121
      %p133 = scmp.eq.s32.totalorder %s27, 1
      %p134 = por %p132, %p133
      %p136 = scmp.ne.s32.totalorder %s121, %s135
      %p137 = scmp.eq.s32.totalorder %s27, 0
      %p138 = por %p136, %p137
      %s140 = sadd.s32 %s139, 1
      %p143 = scmp.eq.s32.totalorder %s21, 1
      %p144 = scmp.ne.s32.totalorder %s139, %s141
      %p145 = scmp.eq.s32.totalorder %s21, 0
      %p146 = por %p144, %p145
      %p147 = scmp.ne.s32.totalorder %s139, %s141
      %p148 = scmp.eq.s32.totalorder %s26, 1
      %p149 = por %p147, %p148
      %p150 = scmp.ne.s32.totalorder %s141, %s142
      %p151 = scmp.eq.s32.totalorder %s26, 0
      %p152 = por %p150, %p151
      %p153 = scmp.ne.s32.totalorder %s141, %s142
      %p154 = scmp.eq.s32.totalorder %s27, 1
      %p155 = por %p153, %p154
      %p157 = scmp.ne.s32.totalorder %s142, %s156
      %p158 = scmp.eq.s32.totalorder %s27, 0
      %p159 = por %p157, %p158
      %s161 = sadd.s32 %s160, 1
      %p164 = scmp.eq.s32.totalorder %s21, 1
      %p165 = scmp.ne.s32.totalorder %s160, %s162
      %p166 = scmp.eq.s32.totalorder %s21, 0
      %p167 = por %p165, %p166
      %p168 = scmp.ne.s32.totalorder %s160, %s162
      %p169 = scmp.eq.s32.totalorder %s26, 1
      %p170 = por %p168, %p169
      %p171 = scmp.ne.s32.totalorder %s162, %s163
      %p172 = scmp.eq.s32.totalorder %s26, 0
      %p173 = por %p171, %p172
      %p174 = scmp.ne.s32.totalorder %s162, %s163
      %p175 = scmp.eq.s32.totalorder %s27, 1
      %p176 = por %p174, %p175
      %p178 = scmp.ne.s32.totalorder %s163, %s177
      %p179 = scmp.eq.s32.totalorder %s27, 0
      %p180 = por %p178, %p179
      %s181 = ssub.s32 %s21, %s28
      %p182 = scmp.eq.s32.totalorder %s181, 0
      %s184 = sadd.s32 %s183, 1
      %s185 = scalar_select %p182, %s183, %s184
      %p188 = pneg %p182
      %p189 = scmp.eq.s32.totalorder %s21, 1
      %p190 = por %p188, %p189
      %p191 = scmp.ne.s32.totalorder %s183, %s186
      %p192 = scmp.eq.s32.totalorder %s21, 0
      %p193 = por %p191, %p192
      %p194 = scmp.ne.s32.totalorder %s183, %s186
      %p195 = scmp.eq.s32.totalorder %s26, 1
      %p196 = por %p194, %p195
      %p197 = scmp.ne.s32.totalorder %s186, %s187
      %p198 = scmp.eq.s32.totalorder %s26, 0
      %p199 = por %p197, %p198
      %p200 = scmp.ne.s32.totalorder %s186, %s187
      %p201 = scmp.eq.s32.totalorder %s27, 1
      %p202 = por %p200, %p201
      %p204 = scmp.ne.s32.totalorder %s187, %s203
      %p205 = scmp.eq.s32.totalorder %s27, 0
      %p206 = por %p204, %p205
      %p207 = scmp.le.s32.totalorder 1, %s21
      %p208 = scmp.lt.s32.totalorder %s21, 3
      %p209 = pnand %p207, %p208
      %p210 = pneg %p209
      // Predicated region
      $region9: #{tpu_custom_call.1} parent=5 // pred_check
        _
      $region10: #{tpu_custom_call.1} parent=5 // pred_check_branch
        %212 = sbr.rel (%p209) target = $region12
      $region11: #{tpu_custom_call.1} parent=5 // pred_region
        %s213 = ssub.s32 %s21, 1
        // Predicated region
        $region13: #{tpu_custom_call.1} parent=11 // pred_check
          %p214 = pneg %p68
        $region14: #{tpu_custom_call.1} parent=11 // pred_check_branch
          %216 = sbr.rel (%p214) target = $region16
        $region15: #{tpu_custom_call.1} parent=11 // pred_region
          %s218 = ssub.s32 256, 256
          %219 = vsyncadd [#allocation6], %s218
          %s220 = sshll.u32 [#allocation5], 4
          %s221 = int_to_ptr.vmem [resolvable:$true] %s220
          %226 = dma.hbm_to_vmem [thread:$0]  %s1, 256, %s221, [#allocation6], 128, 128, 8
        $region16: #{tpu_custom_call.1} parent=11 // pred_fallthru
          _
        // Predicated region
        $region17: #{tpu_custom_call.1} parent=11 // pred_check
          %p227 = pneg %p89
        $region18: #{tpu_custom_call.1} parent=11 // pred_check_branch
          %229 = sbr.rel (%p227) target = $region20
        $region19: #{tpu_custom_call.1} parent=11 // pred_region
          %s231 = ssub.s32 12288, 12288
          %232 = vsyncadd [#allocation6], %s231
          %s233 = sshll.u32 [#allocation7], 4
          %s234 = int_to_ptr.vmem [resolvable:$true] %s233
          %239 = dma.hbm_to_vmem [thread:$0]  %s2, 12288, %s234, [#allocation6], 256, 256, 16
        $region20: #{tpu_custom_call.1} parent=11 // pred_fallthru
          _
        // Predicated region
        $region21: #{tpu_custom_call.1} parent=11 // pred_check
          %p240 = pneg %p110
        $region22: #{tpu_custom_call.1} parent=11 // pred_check_branch
          %242 = sbr.rel (%p240) target = $region24
        $region23: #{tpu_custom_call.1} parent=11 // pred_region
          _
        $region24: #{tpu_custom_call.1} parent=11 // pred_fallthru
          _
        // Predicated region
        $region25: #{tpu_custom_call.1} parent=11 // pred_check
          %p243 = pneg %p131
        $region26: #{tpu_custom_call.1} parent=11 // pred_check_branch
          %245 = sbr.rel (%p243) target = $region28
        $region27: #{tpu_custom_call.1} parent=11 // pred_region
          _
        $region28: #{tpu_custom_call.1} parent=11 // pred_fallthru
          _
        // Predicated region
        $region29: #{tpu_custom_call.1} parent=11 // pred_check
          %p246 = pneg %p152
        $region30: #{tpu_custom_call.1} parent=11 // pred_check_branch
          %248 = sbr.rel (%p246) target = $region32
        $region31: #{tpu_custom_call.1} parent=11 // pred_region
          %s250 = ssub.s32 24576, 24576
          %251 = vsyncadd [#allocation9], %s250
          %s252 = sshll.u32 [#allocation8], 4
          %s253 = int_to_ptr.vmem [resolvable:$true] %s252
          %258 = dma.hbm_to_vmem [thread:$0]  %s5, 24576, %s253, [#allocation9], 256, 256, 16
        $region32: #{tpu_custom_call.1} parent=11 // pred_fallthru
          _
        // Predicated region
        $region33: #{tpu_custom_call.1} parent=11 // pred_check
          %p259 = pneg %p173
        $region34: #{tpu_custom_call.1} parent=11 // pred_check_branch
          %261 = sbr.rel (%p259) target = $region36
        $region35: #{tpu_custom_call.1} parent=11 // pred_region
          _
        $region36: #{tpu_custom_call.1} parent=11 // pred_fallthru
          _
      $region12: #{tpu_custom_call.1} parent=5 // pred_fallthru
        _
      %p262 = scmp.lt.s32.totalorder %s21, 2
      // Predicated region
      $region37: #{tpu_custom_call.1} parent=5 // pred_check
        %p263 = pneg %p262
      $region38: #{tpu_custom_call.1} parent=5 // pred_check_branch
        %265 = sbr.rel (%p263) target = $region40
      $region39: #{tpu_custom_call.1} parent=5 // pred_region
        // Predicated region
        $region41: #{tpu_custom_call.1} parent=39 // pred_check
          %p266 = pneg %p41
        $region42: #{tpu_custom_call.1} parent=39 // pred_check_branch
          %268 = sbr.rel (%p266) target = $region44
        $region43: #{tpu_custom_call.1} parent=39 // pred_region
          %s269 = sand.u32 %s31, 1
          %s270 = scalar_lea.sflag [#allocation3], %s269
          %s271 = sand.u32 %s31, 1
          %s272 = smul.addr %s271, 64
          %s273 = scalar_lea.vmem [#allocation2], %s272
          %s275 = ssub.s32 1024, 1024
          %276 = vsyncadd %s270, %s275
          %s277 = smul.addr %s21, 8
          %s278 = smul.addr %s277, 128
          %s279 = scalar_lea.hbm %s0, %s278
          %s280 = sshll.u32 %s273, 4
          %s281 = int_to_ptr.vmem [resolvable:$true] %s280
          %286 = dma.hbm_to_vmem [thread:$0]  %s279, 1024, %s281, %s270, 128, 128, 8
        $region44: #{tpu_custom_call.1} parent=39 // pred_fallthru
          _
      $region40: #{tpu_custom_call.1} parent=5 // pred_fallthru
        _
      %p287 = scmp.le.s32.totalorder 1, %s21
      %p288 = scmp.lt.s32.totalorder %s21, 3
      %p289 = pnand %p287, %p288
      %p290 = pneg %p289
      // Predicated region
      $region45: #{tpu_custom_call.1} parent=5 // pred_check
        _
      $region46: #{tpu_custom_call.1} parent=5 // pred_check_branch
        %292 = sbr.rel (%p289) target = $region48
      $region47: #{tpu_custom_call.1} parent=5 // pred_region
        %s293 = ssub.s32 %s21, 1
        %s294 = sand.u32 %s34, 1
        %s295 = scalar_lea.sflag [#allocation3], %s294
        %s296 = sand.u32 %s34, 1
        %s297 = smul.addr %s296, 64
        %s298 = scalar_lea.vmem [#allocation2], %s297
        // Predicated region
        $region49: #{tpu_custom_call.1} parent=47 // pred_check
          %p299 = pneg %p47
        $region50: #{tpu_custom_call.1} parent=47 // pred_check_branch
          %301 = sbr.rel (%p299) target = $region52
        $region51: #{tpu_custom_call.1} parent=47 // pred_region
          %302 = dma.done %s295, 1024
        $region52: #{tpu_custom_call.1} parent=47 // pred_fallthru
          _
        // Predicated region
        $region53: #{tpu_custom_call.1} parent=47 // pred_check
          %p303 = pneg %p68
        $region54: #{tpu_custom_call.1} parent=47 // pred_check_branch
          %305 = sbr.rel (%p303) target = $region56
        $region55: #{tpu_custom_call.1} parent=47 // pred_region
          %306 = dma.done [#allocation6], 256
        $region56: #{tpu_custom_call.1} parent=47 // pred_fallthru
          _
        // Predicated region
        $region57: #{tpu_custom_call.1} parent=47 // pred_check
          %p307 = pneg %p89
        $region58: #{tpu_custom_call.1} parent=47 // pred_check_branch
          %309 = sbr.rel (%p307) target = $region60
        $region59: #{tpu_custom_call.1} parent=47 // pred_region
          %310 = dma.done [#allocation6], 12288
        $region60: #{tpu_custom_call.1} parent=47 // pred_fallthru
          _
        // Predicated region
        $region61: #{tpu_custom_call.1} parent=47 // pred_check
          %p311 = pneg %p152
        $region62: #{tpu_custom_call.1} parent=47 // pred_check_branch
          %313 = sbr.rel (%p311) target = $region64
        $region63: #{tpu_custom_call.1} parent=47 // pred_region
          %314 = dma.done [#allocation9], 24576
        $region64: #{tpu_custom_call.1} parent=47 // pred_fallthru
          _
        %s315 = sand.u32 %s34, 1
        %s316 = scalar_lea.sflag [#allocation3], %s315
        %s317 = sand.u32 %s34, 1
        %s318 = smul.addr %s317, 64
        %s319 = scalar_lea.vmem [#allocation2], %s318
        %p320 = pneg %p47
        %p321 = pneg %p44
        %p322 = pneg %p68
        %p323 = pneg %p65
        %p324 = pneg %p89
        %p325 = pneg %p86
        %p326 = pneg %p110
        %p327 = pneg %p107
        %p328 = pneg %p131
        %p329 = pneg %p128
        %p330 = pneg %p152
        %p331 = pneg %p149
        %p332 = pneg %p173
        %p333 = pneg %p170
        %p334 = pneg %p199
        %p335 = pneg %p196
        %s336 = sand.u32 %s186, 1
        %s337 = scalar_lea.sflag [#allocation4], %s336
        %s338 = sand.u32 %s186, 1
        %s339 = smul.addr %s338, 32
        %s340 = scalar_lea.vmem [#allocation10], %s339
        %v341 = vld [vmem:[%s298] sm:$0xff]
        %v342 = vld [vmem:[%s298 + $0x8] sm:$0xff]
        %v343 = vld [vmem:[%s298 + $0x10] sm:$0xff]
        %v344 = vld [vmem:[%s298 + $0x18] sm:$0xff]
        %v345 = vld [vmem:[%s298 + $0x20] sm:$0xff]
        %v346 = vld [vmem:[%s298 + $0x28] sm:$0xff]
        %v347 = vld [vmem:[%s298 + $0x30] sm:$0xff]
        %v348 = vld [vmem:[%s298 + $0x38] sm:$0xff]
        %v349 = vmax.f32 %v341, %v345
        %v350 = vmax.f32 %v343, %v347
        %v351 = vmax.f32 %v349, %v350
        %v352 = vmax.f32 %v342, %v346
        %v353 = vmax.f32 %v344, %v348
        %v354 = vmax.f32 %v352, %v353
        %v355 = vld [vmem:[#allocation5] sm:$0xff]
        %v356 = vld [vmem:[#allocation5 + $0x8] sm:$0xff]
        %vm357 = vcmask 130048
        %v359 = vsel %vm357, %v355, 0
        %v362 = vsel %vm357, %v356, 0
        %364 = vmatprep.subr.mxu0 0.0
        %365 = vmatpush1.msra.mxu0 0.0
        %366 = vmatprep.subr.mxu0 0.0
        %367 = vmatpush1.msra.mxu0 0.0
        %368 = vmatprep.subr.mxu0 0.0
        %369 = vmatpush1.msra.mxu0 0.0
        %370 = vmatprep.subr.mxu0 0.0
        %371 = vmatpush1.msra.mxu0 0.0
        %372 = vmatprep.subr.mxu0 0.0
        %373 = vmatpush1.msra.mxu0 0.0
        %374 = vmatprep.subr.mxu0 0.0
        %375 = vmatpush1.msra.mxu0 0.0
        %376 = vmatprep.subr.mxu0 0.0
        %377 = vmatpush1.msra.mxu0 0.0
        %378 = vmatprep.subr.mxu0 0.0
        %379 = vmatpush1.msra.mxu0 0.0
        %380 = vmatprep.subr.mxu0 0.0
        %381 = vmatpush1.msra.mxu0 0.0
        %382 = vmatprep.subr.mxu0 0.0
        %383 = vmatpush1.msra.mxu0 0.0
        %384 = vmatprep.subr.mxu0 0.0
        %385 = vmatpush1.msra.mxu0 0.0
        %386 = vmatprep.subr.mxu0 0.0
        %387 = vmatpush1.msra.mxu0 0.0
        %388 = vmatprep.subr.mxu0 0.0
        %389 = vmatpush1.msra.mxu0 0.0
        %390 = vmatprep.subr.mxu0 0.0
        %391 = vmatpush1.msra.mxu0 0.0
        %392 = vmatprep.subr.mxu0 0.0
        %393 = vmatpush1.msra.mxu0 %v354
        %394 = vmatprep.subr.mxu0 0.0
        %395 = vmatpush1.msra.mxu0 %v351
        %396 = vmatprep.subr.mxu0 0.0
        %397 = vmatpush2.msra.mxu0 0.0
        %398 = vmatprep.subr.mxu0 0.0
        %399 = vmatpush2.msra.mxu0 0.0
        %400 = vmatprep.subr.mxu0 0.0
        %401 = vmatpush2.msra.mxu0 0.0
        %402 = vmatprep.subr.mxu0 0.0
        %403 = vmatpush2.msra.mxu0 0.0
        %404 = vmatprep.subr.mxu0 0.0
        %405 = vmatpush2.msra.mxu0 0.0
        %406 = vmatprep.subr.mxu0 0.0
        %407 = vmatpush2.msra.mxu0 0.0
        %408 = vmatprep.subr.mxu0 0.0
        %409 = vmatpush2.msra.mxu0 0.0
        %410 = vmatprep.subr.mxu0 0.0
        %411 = vmatpush2.msra.mxu0 0.0
        %412 = vmatprep.subr.mxu0 0.0
        %413 = vmatpush2.msra.mxu0 0.0
        %414 = vmatprep.subr.mxu0 0.0
        %415 = vmatpush2.msra.mxu0 0.0
        %416 = vmatprep.subr.mxu0 0.0
        %417 = vmatpush2.msra.mxu0 0.0
        %418 = vmatprep.subr.mxu0 0.0
        %419 = vmatpush2.msra.mxu0 0.0
        %420 = vmatprep.subr.mxu0 0.0
        %421 = vmatpush2.msra.mxu0 0.0
        %422 = vmatprep.subr.mxu0 0.0
        %423 = vmatpush2.msra.mxu0 0.0
        %424 = vmatprep.subr.mxu0 0.0
        %425 = vmatpush2.msra.mxu0 0.0
        %426 = vmatprep.subr.mxu0 0.0
        %427 = vmatpush2.msra.mxu0 0.0
        %428 = vmatprep.mubr.f32.mxu0 0.0
        %429 = vmatmul.mubr.f32.gmra.mxu0 %v359
        %v430 = vpop.f32.mrf.mxu0
        %v431 = vadd.f32 0.0, %v430
        %v432 = vpop.f32.mrf.mxu0
        %433 = vmatprep.mubr.f32.mxu0 0.0
        %434 = vmatmul.mubr.f32.gmra.mxu0 %v362
        %v435 = vpop.f32.mrf.mxu0
        %v436 = vadd.f32 0.0, %v435
        %v437 = vpop.f32.mrf.mxu0
        %438 = vdwg.mxu0
        %439 = vmatprep.subr.mxu0 0.0
        %440 = vmatpush1.msra.mxu0 0.0
        %441 = vmatprep.subr.mxu0 0.0
        %442 = vmatpush1.msra.mxu0 0.0
        %443 = vmatprep.subr.mxu0 0.0
        %444 = vmatpush1.msra.mxu0 0.0
        %445 = vmatprep.subr.mxu0 0.0
        %446 = vmatpush1.msra.mxu0 0.0
        %447 = vmatprep.subr.mxu0 0.0
        %448 = vmatpush1.msra.mxu0 0.0
        %449 = vmatprep.subr.mxu0 0.0
        %450 = vmatpush1.msra.mxu0 0.0
        %451 = vmatprep.subr.mxu0 0.0
        %452 = vmatpush1.msra.mxu0 0.0
        %453 = vmatprep.subr.mxu0 0.0
        %454 = vmatpush1.msra.mxu0 0.0
        %455 = vmatprep.subr.mxu0 0.0
        %456 = vmatpush1.msra.mxu0 0.0
        %457 = vmatprep.subr.mxu0 0.0
        %458 = vmatpush1.msra.mxu0 0.0
        %459 = vmatprep.subr.mxu0 0.0
        %460 = vmatpush1.msra.mxu0 0.0
        %461 = vmatprep.subr.mxu0 0.0
        %462 = vmatpush1.msra.mxu0 0.0
        %463 = vmatprep.subr.mxu0 0.0
        %464 = vmatpush1.msra.mxu0 0.0
        %465 = vmatprep.subr.mxu0 0.0
        %466 = vmatpush1.msra.mxu0 0.0
        %467 = vmatprep.subr.mxu0 0.0
        %468 = vmatpush1.msra.mxu0 %v436
        %469 = vmatprep.subr.mxu0 0.0
        %470 = vmatpush1.msra.mxu0 %v431
        %471 = vmatprep.subr.mxu0 0.0
        %472 = vmatpush2.msra.mxu0 0.0
        %473 = vmatprep.subr.mxu0 0.0
        %474 = vmatpush2.msra.mxu0 0.0
        %475 = vmatprep.subr.mxu0 0.0
        %476 = vmatpush2.msra.mxu0 0.0
        %477 = vmatprep.subr.mxu0 0.0
        %478 = vmatpush2.msra.mxu0 0.0
        %479 = vmatprep.subr.mxu0 0.0
        %480 = vmatpush2.msra.mxu0 0.0
        %481 = vmatprep.subr.mxu0 0.0
        %482 = vmatpush2.msra.mxu0 0.0
        %483 = vmatprep.subr.mxu0 0.0
        %484 = vmatpush2.msra.mxu0 0.0
        %485 = vmatprep.subr.mxu0 0.0
        %486 = vmatpush2.msra.mxu0 0.0
        %487 = vmatprep.subr.mxu0 0.0
        %488 = vmatpush2.msra.mxu0 0.0
        %489 = vmatprep.subr.mxu0 0.0
        %490 = vmatpush2.msra.mxu0 0.0
        %491 = vmatprep.subr.mxu0 0.0
        %492 = vmatpush2.msra.mxu0 0.0
        %493 = vmatprep.subr.mxu0 0.0
        %494 = vmatpush2.msra.mxu0 0.0
        %495 = vmatprep.subr.mxu0 0.0
        %496 = vmatpush2.msra.mxu0 0.0
        %497 = vmatprep.subr.mxu0 0.0
        %498 = vmatpush2.msra.mxu0 0.0
        %499 = vmatprep.subr.mxu0 0.0
        %500 = vmatpush2.msra.mxu0 0.0
        %501 = vmatprep.subr.mxu0 0.0
        %502 = vmatpush2.msra.mxu0 0.0
        %503 = vmatprep.mubr.f32.mxu0 0.0
        %504 = vmatmul.mubr.f32.gmra.mxu0 %v359
        %v505 = vpop.f32.mrf.mxu0
        %v506 = vadd.f32 0.0, %v505
        %v507 = vpop.f32.mrf.mxu0
        %508 = vmatprep.mubr.f32.mxu0 0.0
        %509 = vmatmul.mubr.f32.gmra.mxu0 %v362
        %v510 = vpop.f32.mrf.mxu0
        %v511 = vadd.f32 0.0, %v510
        %v512 = vpop.f32.mrf.mxu0
        %513 = vdwg.mxu0
        %v514 = vmul.f32 %v506, 2.0
        %v515 = vmul.f32 %v511, 2.0
        %v516 = vsub.f32 %v514, %v351
        %v517 = vsub.f32 %v515, %v354
        %v518 = vld [vmem:[#allocation7] sm:$0xff]
        %v519 = vld [vmem:[#allocation7 + $0x8] sm:$0xff]
        %v520 = vld [vmem:[#allocation7 + $0x10] sm:$0xff]
        %v521 = vld [vmem:[#allocation7 + $0x18] sm:$0xff]
        %v522 = vld [vmem:[#allocation7 + $0x20] sm:$0xff]
        %v523 = vld [vmem:[#allocation7 + $0x28] sm:$0xff]
        %v524 = vld [vmem:[#allocation7 + $0x30] sm:$0xff]
        %v525 = vld [vmem:[#allocation7 + $0x38] sm:$0xff]
        %v526 = vld [vmem:[#allocation7 + $0x40] sm:$0xff]
        %v527 = vld [vmem:[#allocation7 + $0x48] sm:$0xff]
        %v528 = vld [vmem:[#allocation7 + $0x50] sm:$0xff]
        %v529 = vld [vmem:[#allocation7 + $0x58] sm:$0xff]
        %v530 = vld [vmem:[#allocation7 + $0x60] sm:$0xff]
        %v531 = vld [vmem:[#allocation7 + $0x68] sm:$0xff]
        %v532 = vld [vmem:[#allocation7 + $0x70] sm:$0xff]
        %v533 = vld [vmem:[#allocation7 + $0x78] sm:$0xff]
        %v534 = vld [vmem:[#allocation7 + $0x80] sm:$0xff]
        %v535 = vld [vmem:[#allocation7 + $0x88] sm:$0xff]
        %v536 = vld [vmem:[#allocation7 + $0x90] sm:$0xff]
        %v537 = vld [vmem:[#allocation7 + $0x98] sm:$0xff]
        %v538 = vld [vmem:[#allocation7 + $0xa0] sm:$0xff]
        %v539 = vld [vmem:[#allocation7 + $0xa8] sm:$0xff]
        %v540 = vld [vmem:[#allocation7 + $0xb0] sm:$0xff]
        %v541 = vld [vmem:[#allocation7 + $0xb8] sm:$0xff]
        %v542 = vld [vmem:[#allocation7 + $0xc0] sm:$0xff]
        %v543 = vld [vmem:[#allocation7 + $0xc8] sm:$0xff]
        %v544 = vld [vmem:[#allocation7 + $0xd0] sm:$0xff]
        %v545 = vld [vmem:[#allocation7 + $0xd8] sm:$0xff]
        %v546 = vld [vmem:[#allocation7 + $0xe0] sm:$0xff]
        %v547 = vld [vmem:[#allocation7 + $0xe8] sm:$0xff]
        %v548 = vld [vmem:[#allocation7 + $0xf0] sm:$0xff]
        %v549 = vld [vmem:[#allocation7 + $0xf8] sm:$0xff]
        %v550 = vld [vmem:[#allocation7 + $0x100] sm:$0xff]
        %v551 = vld [vmem:[#allocation7 + $0x108] sm:$0xff]
        %v552 = vld [vmem:[#allocation7 + $0x110] sm:$0xff]
        %v553 = vld [vmem:[#allocation7 + $0x118] sm:$0xff]
        %v554 = vld [vmem:[#allocation7 + $0x120] sm:$0xff]
        %v555 = vld [vmem:[#allocation7 + $0x128] sm:$0xff]
        %v556 = vld [vmem:[#allocation7 + $0x130] sm:$0xff]
        %v557 = vld [vmem:[#allocation7 + $0x138] sm:$0xff]
        %v558 = vld [vmem:[#allocation7 + $0x140] sm:$0xff]
        %v559 = vld [vmem:[#allocation7 + $0x148] sm:$0xff]
        %v560 = vld [vmem:[#allocation7 + $0x150] sm:$0xff]
        %v561 = vld [vmem:[#allocation7 + $0x158] sm:$0xff]
        %v562 = vld [vmem:[#allocation7 + $0x160] sm:$0xff]
        %v563 = vld [vmem:[#allocation7 + $0x168] sm:$0xff]
        %v564 = vld [vmem:[#allocation7 + $0x170] sm:$0xff]
        %v565 = vld [vmem:[#allocation7 + $0x178] sm:$0xff]
        %v566 = vld [vmem:[#allocation7 + $0x180] sm:$0xff]
        %v567 = vld [vmem:[#allocation7 + $0x188] sm:$0xff]
        %v568 = vld [vmem:[#allocation7 + $0x190] sm:$0xff]
        %v569 = vld [vmem:[#allocation7 + $0x198] sm:$0xff]
        %v570 = vld [vmem:[#allocation7 + $0x1a0] sm:$0xff]
        %v571 = vld [vmem:[#allocation7 + $0x1a8] sm:$0xff]
        %v572 = vld [vmem:[#allocation7 + $0x1b0] sm:$0xff]
        %v573 = vld [vmem:[#allocation7 + $0x1b8] sm:$0xff]
        %v574 = vld [vmem:[#allocation7 + $0x1c0] sm:$0xff]
        %v575 = vld [vmem:[#allocation7 + $0x1c8] sm:$0xff]
        %v576 = vld [vmem:[#allocation7 + $0x1d0] sm:$0xff]
        %v577 = vld [vmem:[#allocation7 + $0x1d8] sm:$0xff]
        %v578 = vld [vmem:[#allocation7 + $0x1e0] sm:$0xff]
        %v579 = vld [vmem:[#allocation7 + $0x1e8] sm:$0xff]
        %v580 = vld [vmem:[#allocation7 + $0x1f0] sm:$0xff]
        %v581 = vld [vmem:[#allocation7 + $0x1f8] sm:$0xff]
        %v582 = vld [vmem:[#allocation7 + $0x200] sm:$0xff]
        %v583 = vld [vmem:[#allocation7 + $0x208] sm:$0xff]
        %v584 = vld [vmem:[#allocation7 + $0x210] sm:$0xff]
        %v585 = vld [vmem:[#allocation7 + $0x218] sm:$0xff]
        %v586 = vld [vmem:[#allocation7 + $0x220] sm:$0xff]
        %v587 = vld [vmem:[#allocation7 + $0x228] sm:$0xff]
        %v588 = vld [vmem:[#allocation7 + $0x230] sm:$0xff]
        %v589 = vld [vmem:[#allocation7 + $0x238] sm:$0xff]
        %v590 = vld [vmem:[#allocation7 + $0x240] sm:$0xff]
        %v591 = vld [vmem:[#allocation7 + $0x248] sm:$0xff]
        %v592 = vld [vmem:[#allocation7 + $0x250] sm:$0xff]
        %v593 = vld [vmem:[#allocation7 + $0x258] sm:$0xff]
        %v594 = vld [vmem:[#allocation7 + $0x260] sm:$0xff]
        %v595 = vld [vmem:[#allocation7 + $0x268] sm:$0xff]
        %v596 = vld [vmem:[#allocation7 + $0x270] sm:$0xff]
        %v597 = vld [vmem:[#allocation7 + $0x278] sm:$0xff]
        %v598 = vld [vmem:[#allocation7 + $0x280] sm:$0xff]
        %v599 = vld [vmem:[#allocation7 + $0x288] sm:$0xff]
        %v600 = vld [vmem:[#allocation7 + $0x290] sm:$0xff]
        %v601 = vld [vmem:[#allocation7 + $0x298] sm:$0xff]
        %v602 = vld [vmem:[#allocation7 + $0x2a0] sm:$0xff]
        %v603 = vld [vmem:[#allocation7 + $0x2a8] sm:$0xff]
        %v604 = vld [vmem:[#allocation7 + $0x2b0] sm:$0xff]
        %v605 = vld [vmem:[#allocation7 + $0x2b8] sm:$0xff]
        %v606 = vld [vmem:[#allocation7 + $0x2c0] sm:$0xff]
        %v607 = vld [vmem:[#allocation7 + $0x2c8] sm:$0xff]
        %v608 = vld [vmem:[#allocation7 + $0x2d0] sm:$0xff]
        %v609 = vld [vmem:[#allocation7 + $0x2d8] sm:$0xff]
        %v610 = vld [vmem:[#allocation7 + $0x2e0] sm:$0xff]
        %v611 = vld [vmem:[#allocation7 + $0x2e8] sm:$0xff]
        %v612 = vld [vmem:[#allocation7 + $0x2f0] sm:$0xff]
        %v613 = vld [vmem:[#allocation7 + $0x2f8] sm:$0xff]
        %614 = vmatprep.subr.mxu0 %v549
        %615 = vmatpush1.msra.mxu0 %v548
        %616 = vmatprep.subr.mxu0 %v547
        %617 = vmatpush1.msra.mxu0 %v546
        %618 = vmatprep.subr.mxu0 %v545
        %619 = vmatpush1.msra.mxu0 %v544
        %620 = vmatprep.subr.mxu0 %v543
        %621 = vmatpush1.msra.mxu0 %v542
        %622 = vmatprep.subr.mxu0 %v541
        %623 = vmatpush1.msra.mxu0 %v540
        %624 = vmatprep.subr.mxu0 %v539
        %625 = vmatpush1.msra.mxu0 %v538
        %626 = vmatprep.subr.mxu0 %v537
        %627 = vmatpush1.msra.mxu0 %v536
        %628 = vmatprep.subr.mxu0 %v535
        %629 = vmatpush1.msra.mxu0 %v534
        %630 = vmatprep.subr.mxu0 %v533
        %631 = vmatpush1.msra.mxu0 %v532
        %632 = vmatprep.subr.mxu0 %v531
        %633 = vmatpush1.msra.mxu0 %v530
        %634 = vmatprep.subr.mxu0 %v529
        %635 = vmatpush1.msra.mxu0 %v528
        %636 = vmatprep.subr.mxu0 %v527
        %637 = vmatpush1.msra.mxu0 %v526
        %638 = vmatprep.subr.mxu0 %v525
        %639 = vmatpush1.msra.mxu0 %v524
        %640 = vmatprep.subr.mxu0 %v523
        %641 = vmatpush1.msra.mxu0 %v522
        %642 = vmatprep.subr.mxu0 %v521
        %643 = vmatpush1.msra.mxu0 %v520
        %644 = vmatprep.subr.mxu0 %v519
        %645 = vmatpush1.msra.mxu0 %v518
        %646 = vmatprep.subr.mxu0 %v581
        %647 = vmatpush2.msra.mxu0 %v580
        %648 = vmatprep.subr.mxu0 %v579
        %649 = vmatpush2.msra.mxu0 %v578
        %650 = vmatprep.subr.mxu0 %v577
        %651 = vmatpush2.msra.mxu0 %v576
        %652 = vmatprep.subr.mxu0 %v575
        %653 = vmatpush2.msra.mxu0 %v574
        %654 = vmatprep.subr.mxu0 %v573
        %655 = vmatpush2.msra.mxu0 %v572
        %656 = vmatprep.subr.mxu0 %v571
        %657 = vmatpush2.msra.mxu0 %v570
        %658 = vmatprep.subr.mxu0 %v569
        %659 = vmatpush2.msra.mxu0 %v568
        %660 = vmatprep.subr.mxu0 %v567
        %661 = vmatpush2.msra.mxu0 %v566
        %662 = vmatprep.subr.mxu0 %v565
        %663 = vmatpush2.msra.mxu0 %v564
        %664 = vmatprep.subr.mxu0 %v563
        %665 = vmatpush2.msra.mxu0 %v562
        %666 = vmatprep.subr.mxu0 %v561
        %667 = vmatpush2.msra.mxu0 %v560
        %668 = vmatprep.subr.mxu0 %v559
        %669 = vmatpush2.msra.mxu0 %v558
        %670 = vmatprep.subr.mxu0 %v557
        %671 = vmatpush2.msra.mxu0 %v556
        %672 = vmatprep.subr.mxu0 %v555
        %673 = vmatpush2.msra.mxu0 %v554
        %674 = vmatprep.subr.mxu0 %v553
        %675 = vmatpush2.msra.mxu0 %v552
        %676 = vmatprep.subr.mxu0 %v551
        %677 = vmatpush2.msra.mxu0 %v550
        %678 = vmatprep.mubr.f32.mxu0 %v431
        %679 = vmatmul.mubr.f32.gmra.mxu0 %v351
        %v680 = vpop.f32.mrf.mxu0
        %v681 = vadd.f32 0.0, %v680
        %v682 = vpop.f32.mrf.mxu0
        %v683 = vadd.f32 0.0, %v682
        %684 = vmatprep.mubr.f32.mxu0 %v436
        %685 = vmatmul.mubr.f32.gmra.mxu0 %v354
        %v686 = vpop.f32.mrf.mxu0
        %v687 = vadd.f32 0.0, %v686
        %v688 = vpop.f32.mrf.mxu0
        %v689 = vadd.f32 0.0, %v688
        %690 = vdwg.mxu0
        %691 = vmatprep.subr.mxu0 %v613
        %692 = vmatpush1.msra.mxu0 %v612
        %693 = vmatprep.subr.mxu0 %v611
        %694 = vmatpush1.msra.mxu0 %v610
        %695 = vmatprep.subr.mxu0 %v609
        %696 = vmatpush1.msra.mxu0 %v608
        %697 = vmatprep.subr.mxu0 %v607
        %698 = vmatpush1.msra.mxu0 %v606
        %699 = vmatprep.subr.mxu0 %v605
        %700 = vmatpush1.msra.mxu0 %v604
        %701 = vmatprep.subr.mxu0 %v603
        %702 = vmatpush1.msra.mxu0 %v602
        %703 = vmatprep.subr.mxu0 %v601
        %704 = vmatpush1.msra.mxu0 %v600
        %705 = vmatprep.subr.mxu0 %v599
        %706 = vmatpush1.msra.mxu0 %v598
        %707 = vmatprep.subr.mxu0 %v597
        %708 = vmatpush1.msra.mxu0 %v596
        %709 = vmatprep.subr.mxu0 %v595
        %710 = vmatpush1.msra.mxu0 %v594
        %711 = vmatprep.subr.mxu0 %v593
        %712 = vmatpush1.msra.mxu0 %v592
        %713 = vmatprep.subr.mxu0 %v591
        %714 = vmatpush1.msra.mxu0 %v590
        %715 = vmatprep.subr.mxu0 %v589
        %716 = vmatpush1.msra.mxu0 %v588
        %717 = vmatprep.subr.mxu0 %v587
        %718 = vmatpush1.msra.mxu0 %v586
        %719 = vmatprep.subr.mxu0 %v585
        %720 = vmatpush1.msra.mxu0 %v584
        %721 = vmatprep.subr.mxu0 %v583
        %722 = vmatpush1.msra.mxu0 %v582
        %723 = vmatprep.subr.mxu0 0.0
        %724 = vmatpush2.msra.mxu0 0.0
        %725 = vmatprep.subr.mxu0 0.0
        %726 = vmatpush2.msra.mxu0 0.0
        %727 = vmatprep.subr.mxu0 0.0
        %728 = vmatpush2.msra.mxu0 0.0
        %729 = vmatprep.subr.mxu0 0.0
        %730 = vmatpush2.msra.mxu0 0.0
        %731 = vmatprep.subr.mxu0 0.0
        %732 = vmatpush2.msra.mxu0 0.0
        %733 = vmatprep.subr.mxu0 0.0
        %734 = vmatpush2.msra.mxu0 0.0
        %735 = vmatprep.subr.mxu0 0.0
        %736 = vmatpush2.msra.mxu0 0.0
        %737 = vmatprep.subr.mxu0 0.0
        %738 = vmatpush2.msra.mxu0 0.0
        %739 = vmatprep.subr.mxu0 0.0
        %740 = vmatpush2.msra.mxu0 0.0
        %741 = vmatprep.subr.mxu0 0.0
        %742 = vmatpush2.msra.mxu0 0.0
        %743 = vmatprep.subr.mxu0 0.0
        %744 = vmatpush2.msra.mxu0 0.0
        %745 = vmatprep.subr.mxu0 0.0
        %746 = vmatpush2.msra.mxu0 0.0
        %747 = vmatprep.subr.mxu0 0.0
        %748 = vmatpush2.msra.mxu0 0.0
        %749 = vmatprep.subr.mxu0 0.0
        %750 = vmatpush2.msra.mxu0 0.0
        %751 = vmatprep.subr.mxu0 0.0
        %752 = vmatpush2.msra.mxu0 0.0
        %753 = vmatprep.subr.mxu0 0.0
        %754 = vmatpush2.msra.mxu0 0.0
        %755 = vmatprep.mubr.f32.mxu0 0.0
        %756 = vmatmul.mubr.f32.gmra.mxu0 %v516
        %v757 = vpop.f32.mrf.mxu0
        %v758 = vadd.f32 %v681, %v757
        %v759 = vpop.f32.mrf.mxu0
        %v760 = vadd.f32 %v683, %v759
        %761 = vmatprep.mubr.f32.mxu0 0.0
        %762 = vmatmul.mubr.f32.gmra.mxu0 %v517
        %v763 = vpop.f32.mrf.mxu0
        %v764 = vadd.f32 %v687, %v763
        %v765 = vpop.f32.mrf.mxu0
        %v766 = vadd.f32 %v689, %v765
        %767 = vdwg.mxu0
        %v768 = vld [vmem:[%s3] sm:$0x3]
        %v770 = vlaneseq
        %v771 = vshrl.u32 %v770, 7
        %v772 = vsub.s32 0, %v771
        %v773 = vrot.slane %v768, %v772
        %v774 = vlaneseq
        %v775 = vshrl.u32 %v774, 7
        %v776 = vsub.s32 1, %v775
        %v777 = vrot.slane %v768, %v776
        %v780 = vmul.f32 %v758, %v773
        %v781 = vmul.f32 %v760, %v777
        %v782 = vmul.f32 %v764, %v773
        %v783 = vmul.f32 %v766, %v777
        %v784 = vld [vmem:[%s4] sm:$0x3]
        %v786 = vlaneseq
        %v787 = vshrl.u32 %v786, 7
        %v788 = vsub.s32 0, %v787
        %v789 = vrot.slane %v784, %v788
        %v790 = vlaneseq
        %v791 = vshrl.u32 %v790, 7
        %v792 = vsub.s32 1, %v791
        %v793 = vrot.slane %v784, %v792
        %v796 = vadd.f32 %v780, %v789
        %v797 = vadd.f32 %v781, %v793
        %v798 = vadd.f32 %v782, %v789
        %v799 = vadd.f32 %v783, %v793
        %v800 = vmax.f32 %v796, 0.0
        %v801 = vmax.f32 %v797, 0.0
        %v802 = vmax.f32 %v798, 0.0
        %v803 = vmax.f32 %v799, 0.0
        %804 = vmatprep.subr.mxu0 0.0
        %805 = vmatpush1.msra.mxu0 0.0
        %806 = vmatprep.subr.mxu0 0.0
        %807 = vmatpush1.msra.mxu0 0.0
        %808 = vmatprep.subr.mxu0 0.0
        %809 = vmatpush1.msra.mxu0 0.0
        %810 = vmatprep.subr.mxu0 0.0
        %811 = vmatpush1.msra.mxu0 0.0
        %812 = vmatprep.subr.mxu0 0.0
        %813 = vmatpush1.msra.mxu0 0.0
        %814 = vmatprep.subr.mxu0 0.0
        %815 = vmatpush1.msra.mxu0 0.0
        %816 = vmatprep.subr.mxu0 0.0
        %817 = vmatpush1.msra.mxu0 0.0
        %818 = vmatprep.subr.mxu0 0.0
        %819 = vmatpush1.msra.mxu0 0.0
        %820 = vmatprep.subr.mxu0 0.0
        %821 = vmatpush1.msra.mxu0 0.0
        %822 = vmatprep.subr.mxu0 0.0
        %823 = vmatpush1.msra.mxu0 0.0
        %824 = vmatprep.subr.mxu0 0.0
        %825 = vmatpush1.msra.mxu0 0.0
        %826 = vmatprep.subr.mxu0 0.0
        %827 = vmatpush1.msra.mxu0 0.0
        %828 = vmatprep.subr.mxu0 0.0
        %829 = vmatpush1.msra.mxu0 0.0
        %830 = vmatprep.subr.mxu0 0.0
        %831 = vmatpush1.msra.mxu0 0.0
        %832 = vmatprep.subr.mxu0 %v803
        %833 = vmatpush1.msra.mxu0 %v802
        %834 = vmatprep.subr.mxu0 %v801
        %835 = vmatpush1.msra.mxu0 %v800
        %836 = vmatprep.subr.mxu0 0.0
        %837 = vmatpush2.msra.mxu0 0.0
        %838 = vmatprep.subr.mxu0 0.0
        %839 = vmatpush2.msra.mxu0 0.0
        %840 = vmatprep.subr.mxu0 0.0
        %841 = vmatpush2.msra.mxu0 0.0
        %842 = vmatprep.subr.mxu0 0.0
        %843 = vmatpush2.msra.mxu0 0.0
        %844 = vmatprep.subr.mxu0 0.0
        %845 = vmatpush2.msra.mxu0 0.0
        %846 = vmatprep.subr.mxu0 0.0
        %847 = vmatpush2.msra.mxu0 0.0
        %848 = vmatprep.subr.mxu0 0.0
        %849 = vmatpush2.msra.mxu0 0.0
        %850 = vmatprep.subr.mxu0 0.0
        %851 = vmatpush2.msra.mxu0 0.0
        %852 = vmatprep.subr.mxu0 0.0
        %853 = vmatpush2.msra.mxu0 0.0
        %854 = vmatprep.subr.mxu0 0.0
        %855 = vmatpush2.msra.mxu0 0.0
        %856 = vmatprep.subr.mxu0 0.0
        %857 = vmatpush2.msra.mxu0 0.0
        %858 = vmatprep.subr.mxu0 0.0
        %859 = vmatpush2.msra.mxu0 0.0
        %860 = vmatprep.subr.mxu0 0.0
        %861 = vmatpush2.msra.mxu0 0.0
        %862 = vmatprep.subr.mxu0 0.0
        %863 = vmatpush2.msra.mxu0 0.0
        %864 = vmatprep.subr.mxu0 0.0
        %865 = vmatpush2.msra.mxu0 0.0
        %866 = vmatprep.subr.mxu0 0.0
        %867 = vmatpush2.msra.mxu0 0.0
        %868 = vmatprep.mubr.f32.mxu0 0.0
        %869 = vmatmul.mubr.f32.gmra.mxu0 %v359
        %v870 = vpop.f32.mrf.mxu0
        %v871 = vadd.f32 0.0, %v870
        %v872 = vpop.f32.mrf.mxu0
        %v873 = vadd.f32 0.0, %v872
        %874 = vmatprep.mubr.f32.mxu0 0.0
        %875 = vmatmul.mubr.f32.gmra.mxu0 %v362
        %v876 = vpop.f32.mrf.mxu0
        %v877 = vadd.f32 0.0, %v876
        %v878 = vpop.f32.mrf.mxu0
        %v879 = vadd.f32 0.0, %v878
        %880 = vdwg.mxu0
        %881 = vmatprep.subr.mxu0 0.0
        %882 = vmatpush1.msra.mxu0 0.0
        %883 = vmatprep.subr.mxu0 0.0
        %884 = vmatpush1.msra.mxu0 0.0
        %885 = vmatprep.subr.mxu0 0.0
        %886 = vmatpush1.msra.mxu0 0.0
        %887 = vmatprep.subr.mxu0 0.0
        %888 = vmatpush1.msra.mxu0 0.0
        %889 = vmatprep.subr.mxu0 0.0
        %890 = vmatpush1.msra.mxu0 0.0
        %891 = vmatprep.subr.mxu0 0.0
        %892 = vmatpush1.msra.mxu0 0.0
        %893 = vmatprep.subr.mxu0 0.0
        %894 = vmatpush1.msra.mxu0 0.0
        %895 = vmatprep.subr.mxu0 0.0
        %896 = vmatpush1.msra.mxu0 0.0
        %897 = vmatprep.subr.mxu0 0.0
        %898 = vmatpush1.msra.mxu0 0.0
        %899 = vmatprep.subr.mxu0 0.0
        %900 = vmatpush1.msra.mxu0 0.0
        %901 = vmatprep.subr.mxu0 0.0
        %902 = vmatpush1.msra.mxu0 0.0
        %903 = vmatprep.subr.mxu0 0.0
        %904 = vmatpush1.msra.mxu0 0.0
        %905 = vmatprep.subr.mxu0 0.0
        %906 = vmatpush1.msra.mxu0 0.0
        %907 = vmatprep.subr.mxu0 0.0
        %908 = vmatpush1.msra.mxu0 0.0
        %909 = vmatprep.subr.mxu0 %v879
        %910 = vmatpush1.msra.mxu0 %v877
        %911 = vmatprep.subr.mxu0 %v873
        %912 = vmatpush1.msra.mxu0 %v871
        %913 = vmatprep.subr.mxu0 0.0
        %914 = vmatpush2.msra.mxu0 0.0
        %915 = vmatprep.subr.mxu0 0.0
        %916 = vmatpush2.msra.mxu0 0.0
        %917 = vmatprep.subr.mxu0 0.0
        %918 = vmatpush2.msra.mxu0 0.0
        %919 = vmatprep.subr.mxu0 0.0
        %920 = vmatpush2.msra.mxu0 0.0
        %921 = vmatprep.subr.mxu0 0.0
        %922 = vmatpush2.msra.mxu0 0.0
        %923 = vmatprep.subr.mxu0 0.0
        %924 = vmatpush2.msra.mxu0 0.0
        %925 = vmatprep.subr.mxu0 0.0
        %926 = vmatpush2.msra.mxu0 0.0
        %927 = vmatprep.subr.mxu0 0.0
        %928 = vmatpush2.msra.mxu0 0.0
        %929 = vmatprep.subr.mxu0 0.0
        %930 = vmatpush2.msra.mxu0 0.0
        %931 = vmatprep.subr.mxu0 0.0
        %932 = vmatpush2.msra.mxu0 0.0
        %933 = vmatprep.subr.mxu0 0.0
        %934 = vmatpush2.msra.mxu0 0.0
        %935 = vmatprep.subr.mxu0 0.0
        %936 = vmatpush2.msra.mxu0 0.0
        %937 = vmatprep.subr.mxu0 0.0
        %938 = vmatpush2.msra.mxu0 0.0
        %939 = vmatprep.subr.mxu0 0.0
        %940 = vmatpush2.msra.mxu0 0.0
        %941 = vmatprep.subr.mxu0 0.0
        %942 = vmatpush2.msra.mxu0 0.0
        %943 = vmatprep.subr.mxu0 0.0
        %944 = vmatpush2.msra.mxu0 0.0
        %945 = vmatprep.mubr.f32.mxu0 0.0
        %946 = vmatmul.mubr.f32.gmra.mxu0 %v359
        %v947 = vpop.f32.mrf.mxu0
        %v948 = vadd.f32 0.0, %v947
        %v949 = vpop.f32.mrf.mxu0
        %v950 = vadd.f32 0.0, %v949
        %951 = vmatprep.mubr.f32.mxu0 0.0
        %952 = vmatmul.mubr.f32.gmra.mxu0 %v362
        %v953 = vpop.f32.mrf.mxu0
        %v954 = vadd.f32 0.0, %v953
        %v955 = vpop.f32.mrf.mxu0
        %v956 = vadd.f32 0.0, %v955
        %957 = vdwg.mxu0
        %v958 = vmul.f32 %v948, 2.0
        %v959 = vmul.f32 %v950, 2.0
        %v960 = vmul.f32 %v954, 2.0
        %v961 = vmul.f32 %v956, 2.0
        %v962 = vsub.f32 %v958, %v800
        %v963 = vsub.f32 %v959, %v801
        %v964 = vsub.f32 %v960, %v802
        %v965 = vsub.f32 %v961, %v803
        %v966 = vld [vmem:[#allocation8] sm:$0xff]
        %v967 = vld [vmem:[#allocation8 + $0x8] sm:$0xff]
        %v968 = vld [vmem:[#allocation8 + $0x10] sm:$0xff]
        %v969 = vld [vmem:[#allocation8 + $0x18] sm:$0xff]
        %v970 = vld [vmem:[#allocation8 + $0x20] sm:$0xff]
        %v971 = vld [vmem:[#allocation8 + $0x28] sm:$0xff]
        %v972 = vld [vmem:[#allocation8 + $0x30] sm:$0xff]
        %v973 = vld [vmem:[#allocation8 + $0x38] sm:$0xff]
        %v974 = vld [vmem:[#allocation8 + $0x40] sm:$0xff]
        %v975 = vld [vmem:[#allocation8 + $0x48] sm:$0xff]
        %v976 = vld [vmem:[#allocation8 + $0x50] sm:$0xff]
        %v977 = vld [vmem:[#allocation8 + $0x58] sm:$0xff]
        %v978 = vld [vmem:[#allocation8 + $0x60] sm:$0xff]
        %v979 = vld [vmem:[#allocation8 + $0x68] sm:$0xff]
        %v980 = vld [vmem:[#allocation8 + $0x70] sm:$0xff]
        %v981 = vld [vmem:[#allocation8 + $0x78] sm:$0xff]
        %v982 = vld [vmem:[#allocation8 + $0x80] sm:$0xff]
        %v983 = vld [vmem:[#allocation8 + $0x88] sm:$0xff]
        %v984 = vld [vmem:[#allocation8 + $0x90] sm:$0xff]
        %v985 = vld [vmem:[#allocation8 + $0x98] sm:$0xff]
        %v986 = vld [vmem:[#allocation8 + $0xa0] sm:$0xff]
        %v987 = vld [vmem:[#allocation8 + $0xa8] sm:$0xff]
        %v988 = vld [vmem:[#allocation8 + $0xb0] sm:$0xff]
        %v989 = vld [vmem:[#allocation8 + $0xb8] sm:$0xff]
        %v990 = vld [vmem:[#allocation8 + $0xc0] sm:$0xff]
        %v991 = vld [vmem:[#allocation8 + $0xc8] sm:$0xff]
        %v992 = vld [vmem:[#allocation8 + $0xd0] sm:$0xff]
        %v993 = vld [vmem:[#allocation8 + $0xd8] sm:$0xff]
        %v994 = vld [vmem:[#allocation8 + $0xe0] sm:$0xff]
        %v995 = vld [vmem:[#allocation8 + $0xe8] sm:$0xff]
        %v996 = vld [vmem:[#allocation8 + $0xf0] sm:$0xff]
        %v997 = vld [vmem:[#allocation8 + $0xf8] sm:$0xff]
        %v998 = vld [vmem:[#allocation8 + $0x100] sm:$0xff]
        %v999 = vld [vmem:[#allocation8 + $0x108] sm:$0xff]
        %v1000 = vld [vmem:[#allocation8 + $0x110] sm:$0xff]
        %v1001 = vld [vmem:[#allocation8 + $0x118] sm:$0xff]
        %v1002 = vld [vmem:[#allocation8 + $0x120] sm:$0xff]
        %v1003 = vld [vmem:[#allocation8 + $0x128] sm:$0xff]
        %v1004 = vld [vmem:[#allocation8 + $0x130] sm:$0xff]
        %v1005 = vld [vmem:[#allocation8 + $0x138] sm:$0xff]
        %v1006 = vld [vmem:[#allocation8 + $0x140] sm:$0xff]
        %v1007 = vld [vmem:[#allocation8 + $0x148] sm:$0xff]
        %v1008 = vld [vmem:[#allocation8 + $0x150] sm:$0xff]
        %v1009 = vld [vmem:[#allocation8 + $0x158] sm:$0xff]
        %v1010 = vld [vmem:[#allocation8 + $0x160] sm:$0xff]
        %v1011 = vld [vmem:[#allocation8 + $0x168] sm:$0xff]
        %v1012 = vld [vmem:[#allocation8 + $0x170] sm:$0xff]
        %v1013 = vld [vmem:[#allocation8 + $0x178] sm:$0xff]
        %v1014 = vld [vmem:[#allocation8 + $0x180] sm:$0xff]
        %v1015 = vld [vmem:[#allocation8 + $0x188] sm:$0xff]
        %v1016 = vld [vmem:[#allocation8 + $0x190] sm:$0xff]
        %v1017 = vld [vmem:[#allocation8 + $0x198] sm:$0xff]
        %v1018 = vld [vmem:[#allocation8 + $0x1a0] sm:$0xff]
        %v1019 = vld [vmem:[#allocation8 + $0x1a8] sm:$0xff]
        %v1020 = vld [vmem:[#allocation8 + $0x1b0] sm:$0xff]
        %v1021 = vld [vmem:[#allocation8 + $0x1b8] sm:$0xff]
        %v1022 = vld [vmem:[#allocation8 + $0x1c0] sm:$0xff]
        %v1023 = vld [vmem:[#allocation8 + $0x1c8] sm:$0xff]
        %v1024 = vld [vmem:[#allocation8 + $0x1d0] sm:$0xff]
        %v1025 = vld [vmem:[#allocation8 + $0x1d8] sm:$0xff]
        %v1026 = vld [vmem:[#allocation8 + $0x1e0] sm:$0xff]
        %v1027 = vld [vmem:[#allocation8 + $0x1e8] sm:$0xff]
        %v1028 = vld [vmem:[#allocation8 + $0x1f0] sm:$0xff]
        %v1029 = vld [vmem:[#allocation8 + $0x1f8] sm:$0xff]
        %v1030 = vld [vmem:[#allocation8 + $0x200] sm:$0xff]
        %v1031 = vld [vmem:[#allocation8 + $0x208] sm:$0xff]
        %v1032 = vld [vmem:[#allocation8 + $0x210] sm:$0xff]
        %v1033 = vld [vmem:[#allocation8 + $0x218] sm:$0xff]
        %v1034 = vld [vmem:[#allocation8 + $0x220] sm:$0xff]
        %v1035 = vld [vmem:[#allocation8 + $0x228] sm:$0xff]
        %v1036 = vld [vmem:[#allocation8 + $0x230] sm:$0xff]
        %v1037 = vld [vmem:[#allocation8 + $0x238] sm:$0xff]
        %v1038 = vld [vmem:[#allocation8 + $0x240] sm:$0xff]
        %v1039 = vld [vmem:[#allocation8 + $0x248] sm:$0xff]
        %v1040 = vld [vmem:[#allocation8 + $0x250] sm:$0xff]
        %v1041 = vld [vmem:[#allocation8 + $0x258] sm:$0xff]
        %v1042 = vld [vmem:[#allocation8 + $0x260] sm:$0xff]
        %v1043 = vld [vmem:[#allocation8 + $0x268] sm:$0xff]
        %v1044 = vld [vmem:[#allocation8 + $0x270] sm:$0xff]
        %v1045 = vld [vmem:[#allocation8 + $0x278] sm:$0xff]
        %v1046 = vld [vmem:[#allocation8 + $0x280] sm:$0xff]
        %v1047 = vld [vmem:[#allocation8 + $0x288] sm:$0xff]
        %v1048 = vld [vmem:[#allocation8 + $0x290] sm:$0xff]
        %v1049 = vld [vmem:[#allocation8 + $0x298] sm:$0xff]
        %v1050 = vld [vmem:[#allocation8 + $0x2a0] sm:$0xff]
        %v1051 = vld [vmem:[#allocation8 + $0x2a8] sm:$0xff]
        %v1052 = vld [vmem:[#allocation8 + $0x2b0] sm:$0xff]
        %v1053 = vld [vmem:[#allocation8 + $0x2b8] sm:$0xff]
        %v1054 = vld [vmem:[#allocation8 + $0x2c0] sm:$0xff]
        %v1055 = vld [vmem:[#allocation8 + $0x2c8] sm:$0xff]
        %v1056 = vld [vmem:[#allocation8 + $0x2d0] sm:$0xff]
        %v1057 = vld [vmem:[#allocation8 + $0x2d8] sm:$0xff]
        %v1058 = vld [vmem:[#allocation8 + $0x2e0] sm:$0xff]
        %v1059 = vld [vmem:[#allocation8 + $0x2e8] sm:$0xff]
        %v1060 = vld [vmem:[#allocation8 + $0x2f0] sm:$0xff]
        %v1061 = vld [vmem:[#allocation8 + $0x2f8] sm:$0xff]
        %v1062 = vld [vmem:[#allocation8 + $0x300] sm:$0xff]
        %v1063 = vld [vmem:[#allocation8 + $0x308] sm:$0xff]
        %v1064 = vld [vmem:[#allocation8 + $0x310] sm:$0xff]
        %v1065 = vld [vmem:[#allocation8 + $0x318] sm:$0xff]
        %v1066 = vld [vmem:[#allocation8 + $0x320] sm:$0xff]
        %v1067 = vld [vmem:[#allocation8 + $0x328] sm:$0xff]
        %v1068 = vld [vmem:[#allocation8 + $0x330] sm:$0xff]
        %v1069 = vld [vmem:[#allocation8 + $0x338] sm:$0xff]
        %v1070 = vld [vmem:[#allocation8 + $0x340] sm:$0xff]
        %v1071 = vld [vmem:[#allocation8 + $0x348] sm:$0xff]
        %v1072 = vld [vmem:[#allocation8 + $0x350] sm:$0xff]
        %v1073 = vld [vmem:[#allocation8 + $0x358] sm:$0xff]
        %v1074 = vld [vmem:[#allocation8 + $0x360] sm:$0xff]
        %v1075 = vld [vmem:[#allocation8 + $0x368] sm:$0xff]
        %v1076 = vld [vmem:[#allocation8 + $0x370] sm:$0xff]
        %v1077 = vld [vmem:[#allocation8 + $0x378] sm:$0xff]
        %v1078 = vld [vmem:[#allocation8 + $0x380] sm:$0xff]
        %v1079 = vld [vmem:[#allocation8 + $0x388] sm:$0xff]
        %v1080 = vld [vmem:[#allocation8 + $0x390] sm:$0xff]
        %v1081 = vld [vmem:[#allocation8 + $0x398] sm:$0xff]
        %v1082 = vld [vmem:[#allocation8 + $0x3a0] sm:$0xff]
        %v1083 = vld [vmem:[#allocation8 + $0x3a8] sm:$0xff]
        %v1084 = vld [vmem:[#allocation8 + $0x3b0] sm:$0xff]
        %v1085 = vld [vmem:[#allocation8 + $0x3b8] sm:$0xff]
        %v1086 = vld [vmem:[#allocation8 + $0x3c0] sm:$0xff]
        %v1087 = vld [vmem:[#allocation8 + $0x3c8] sm:$0xff]
        %v1088 = vld [vmem:[#allocation8 + $0x3d0] sm:$0xff]
        %v1089 = vld [vmem:[#allocation8 + $0x3d8] sm:$0xff]
        %v1090 = vld [vmem:[#allocation8 + $0x3e0] sm:$0xff]
        %v1091 = vld [vmem:[#allocation8 + $0x3e8] sm:$0xff]
        %v1092 = vld [vmem:[#allocation8 + $0x3f0] sm:$0xff]
        %v1093 = vld [vmem:[#allocation8 + $0x3f8] sm:$0xff]
        %v1094 = vld [vmem:[#allocation8 + $0x400] sm:$0xff]
        %v1095 = vld [vmem:[#allocation8 + $0x408] sm:$0xff]
        %v1096 = vld [vmem:[#allocation8 + $0x410] sm:$0xff]
        %v1097 = vld [vmem:[#allocation8 + $0x418] sm:$0xff]
        %v1098 = vld [vmem:[#allocation8 + $0x420] sm:$0xff]
        %v1099 = vld [vmem:[#allocation8 + $0x428] sm:$0xff]
        %v1100 = vld [vmem:[#allocation8 + $0x430] sm:$0xff]
        %v1101 = vld [vmem:[#allocation8 + $0x438] sm:$0xff]
        %v1102 = vld [vmem:[#allocation8 + $0x440] sm:$0xff]
        %v1103 = vld [vmem:[#allocation8 + $0x448] sm:$0xff]
        %v1104 = vld [vmem:[#allocation8 + $0x450] sm:$0xff]
        %v1105 = vld [vmem:[#allocation8 + $0x458] sm:$0xff]
        %v1106 = vld [vmem:[#allocation8 + $0x460] sm:$0xff]
        %v1107 = vld [vmem:[#allocation8 + $0x468] sm:$0xff]
        %v1108 = vld [vmem:[#allocation8 + $0x470] sm:$0xff]
        %v1109 = vld [vmem:[#allocation8 + $0x478] sm:$0xff]
        %v1110 = vld [vmem:[#allocation8 + $0x480] sm:$0xff]
        %v1111 = vld [vmem:[#allocation8 + $0x488] sm:$0xff]
        %v1112 = vld [vmem:[#allocation8 + $0x490] sm:$0xff]
        %v1113 = vld [vmem:[#allocation8 + $0x498] sm:$0xff]
        %v1114 = vld [vmem:[#allocation8 + $0x4a0] sm:$0xff]
        %v1115 = vld [vmem:[#allocation8 + $0x4a8] sm:$0xff]
        %v1116 = vld [vmem:[#allocation8 + $0x4b0] sm:$0xff]
        %v1117 = vld [vmem:[#allocation8 + $0x4b8] sm:$0xff]
        %v1118 = vld [vmem:[#allocation8 + $0x4c0] sm:$0xff]
        %v1119 = vld [vmem:[#allocation8 + $0x4c8] sm:$0xff]
        %v1120 = vld [vmem:[#allocation8 + $0x4d0] sm:$0xff]
        %v1121 = vld [vmem:[#allocation8 + $0x4d8] sm:$0xff]
        %v1122 = vld [vmem:[#allocation8 + $0x4e0] sm:$0xff]
        %v1123 = vld [vmem:[#allocation8 + $0x4e8] sm:$0xff]
        %v1124 = vld [vmem:[#allocation8 + $0x4f0] sm:$0xff]
        %v1125 = vld [vmem:[#allocation8 + $0x4f8] sm:$0xff]
        %v1126 = vld [vmem:[#allocation8 + $0x500] sm:$0xff]
        %v1127 = vld [vmem:[#allocation8 + $0x508] sm:$0xff]
        %v1128 = vld [vmem:[#allocation8 + $0x510] sm:$0xff]
        %v1129 = vld [vmem:[#allocation8 + $0x518] sm:$0xff]
        %v1130 = vld [vmem:[#allocation8 + $0x520] sm:$0xff]
        %v1131 = vld [vmem:[#allocation8 + $0x528] sm:$0xff]
        %v1132 = vld [vmem:[#allocation8 + $0x530] sm:$0xff]
        %v1133 = vld [vmem:[#allocation8 + $0x538] sm:$0xff]
        %v1134 = vld [vmem:[#allocation8 + $0x540] sm:$0xff]
        %v1135 = vld [vmem:[#allocation8 + $0x548] sm:$0xff]
        %v1136 = vld [vmem:[#allocation8 + $0x550] sm:$0xff]
        %v1137 = vld [vmem:[#allocation8 + $0x558] sm:$0xff]
        %v1138 = vld [vmem:[#allocation8 + $0x560] sm:$0xff]
        %v1139 = vld [vmem:[#allocation8 + $0x568] sm:$0xff]
        %v1140 = vld [vmem:[#allocation8 + $0x570] sm:$0xff]
        %v1141 = vld [vmem:[#allocation8 + $0x578] sm:$0xff]
        %v1142 = vld [vmem:[#allocation8 + $0x580] sm:$0xff]
        %v1143 = vld [vmem:[#allocation8 + $0x588] sm:$0xff]
        %v1144 = vld [vmem:[#allocation8 + $0x590] sm:$0xff]
        %v1145 = vld [vmem:[#allocation8 + $0x598] sm:$0xff]
        %v1146 = vld [vmem:[#allocation8 + $0x5a0] sm:$0xff]
        %v1147 = vld [vmem:[#allocation8 + $0x5a8] sm:$0xff]
        %v1148 = vld [vmem:[#allocation8 + $0x5b0] sm:$0xff]
        %v1149 = vld [vmem:[#allocation8 + $0x5b8] sm:$0xff]
        %v1150 = vld [vmem:[#allocation8 + $0x5c0] sm:$0xff]
        %v1151 = vld [vmem:[#allocation8 + $0x5c8] sm:$0xff]
        %v1152 = vld [vmem:[#allocation8 + $0x5d0] sm:$0xff]
        %v1153 = vld [vmem:[#allocation8 + $0x5d8] sm:$0xff]
        %v1154 = vld [vmem:[#allocation8 + $0x5e0] sm:$0xff]
        %v1155 = vld [vmem:[#allocation8 + $0x5e8] sm:$0xff]
        %v1156 = vld [vmem:[#allocation8 + $0x5f0] sm:$0xff]
        %v1157 = vld [vmem:[#allocation8 + $0x5f8] sm:$0xff]
        %v1158 = vld [vmem:[%s6] sm:$0x3]
        %v1160 = vlaneseq
        %v1161 = vshrl.u32 %v1160, 7
        %v1162 = vsub.s32 0, %v1161
        %v1163 = vrot.slane %v1158, %v1162
        %v1164 = vlaneseq
        %v1165 = vshrl.u32 %v1164, 7
        %v1166 = vsub.s32 1, %v1165
        %v1167 = vrot.slane %v1158, %v1166
        %1170 = vmatprep.subr.mxu0 %v997
        %1171 = vmatpush1.msra.mxu0 %v996
        %1172 = vmatprep.subr.mxu0 %v995
        %1173 = vmatpush1.msra.mxu0 %v994
        %1174 = vmatprep.subr.mxu0 %v993
        %1175 = vmatpush1.msra.mxu0 %v992
        %1176 = vmatprep.subr.mxu0 %v991
        %1177 = vmatpush1.msra.mxu0 %v990
        %1178 = vmatprep.subr.mxu0 %v989
        %1179 = vmatpush1.msra.mxu0 %v988
        %1180 = vmatprep.subr.mxu0 %v987
        %1181 = vmatpush1.msra.mxu0 %v986
        %1182 = vmatprep.subr.mxu0 %v985
        %1183 = vmatpush1.msra.mxu0 %v984
        %1184 = vmatprep.subr.mxu0 %v983
        %1185 = vmatpush1.msra.mxu0 %v982
        %1186 = vmatprep.subr.mxu0 %v981
        %1187 = vmatpush1.msra.mxu0 %v980
        %1188 = vmatprep.subr.mxu0 %v979
        %1189 = vmatpush1.msra.mxu0 %v978
        %1190 = vmatprep.subr.mxu0 %v977
        %1191 = vmatpush1.msra.mxu0 %v976
        %1192 = vmatprep.subr.mxu0 %v975
        %1193 = vmatpush1.msra.mxu0 %v974
        %1194 = vmatprep.subr.mxu0 %v973
        %1195 = vmatpush1.msra.mxu0 %v972
        %1196 = vmatprep.subr.mxu0 %v971
        %1197 = vmatpush1.msra.mxu0 %v970
        %1198 = vmatprep.subr.mxu0 %v969
        %1199 = vmatpush1.msra.mxu0 %v968
        %1200 = vmatprep.subr.mxu0 %v967
        %1201 = vmatpush1.msra.mxu0 %v966
        %1202 = vmatprep.subr.mxu0 %v1029
        %1203 = vmatpush2.msra.mxu0 %v1028
        %1204 = vmatprep.subr.mxu0 %v1027
        %1205 = vmatpush2.msra.mxu0 %v1026
        %1206 = vmatprep.subr.mxu0 %v1025
        %1207 = vmatpush2.msra.mxu0 %v1024
        %1208 = vmatprep.subr.mxu0 %v1023
        %1209 = vmatpush2.msra.mxu0 %v1022
        %1210 = vmatprep.subr.mxu0 %v1021
        %1211 = vmatpush2.msra.mxu0 %v1020
        %1212 = vmatprep.subr.mxu0 %v1019
        %1213 = vmatpush2.msra.mxu0 %v1018
        %1214 = vmatprep.subr.mxu0 %v1017
        %1215 = vmatpush2.msra.mxu0 %v1016
        %1216 = vmatprep.subr.mxu0 %v1015
        %1217 = vmatpush2.msra.mxu0 %v1014
        %1218 = vmatprep.subr.mxu0 %v1013
        %1219 = vmatpush2.msra.mxu0 %v1012
        %1220 = vmatprep.subr.mxu0 %v1011
        %1221 = vmatpush2.msra.mxu0 %v1010
        %1222 = vmatprep.subr.mxu0 %v1009
        %1223 = vmatpush2.msra.mxu0 %v1008
        %1224 = vmatprep.subr.mxu0 %v1007
        %1225 = vmatpush2.msra.mxu0 %v1006
        %1226 = vmatprep.subr.mxu0 %v1005
        %1227 = vmatpush2.msra.mxu0 %v1004
        %1228 = vmatprep.subr.mxu0 %v1003
        %1229 = vmatpush2.msra.mxu0 %v1002
        %1230 = vmatprep.subr.mxu0 %v1001
        %1231 = vmatpush2.msra.mxu0 %v1000
        %1232 = vmatprep.subr.mxu0 %v999
        %1233 = vmatpush2.msra.mxu0 %v998
        %1234 = vmatprep.mubr.f32.mxu0 %v801
        %1235 = vmatmul.mubr.f32.gmra.mxu0 %v800
        %v1236 = vpop.f32.mrf.mxu0
        %v1237 = vadd.f32 %v1163, %v1236
        %v1238 = vpop.f32.mrf.mxu0
        %v1239 = vadd.f32 %v1167, %v1238
        %1240 = vmatprep.mubr.f32.mxu0 %v803
        %1241 = vmatmul.mubr.f32.gmra.mxu0 %v802
        %v1242 = vpop.f32.mrf.mxu0
        %v1243 = vadd.f32 %v1163, %v1242
        %v1244 = vpop.f32.mrf.mxu0
        %v1245 = vadd.f32 %v1167, %v1244
        %1246 = vdwg.mxu0
        %1247 = vmatprep.subr.mxu0 %v1061
        %1248 = vmatpush1.msra.mxu0 %v1060
        %1249 = vmatprep.subr.mxu0 %v1059
        %1250 = vmatpush1.msra.mxu0 %v1058
        %1251 = vmatprep.subr.mxu0 %v1057
        %1252 = vmatpush1.msra.mxu0 %v1056
        %1253 = vmatprep.subr.mxu0 %v1055
        %1254 = vmatpush1.msra.mxu0 %v1054
        %1255 = vmatprep.subr.mxu0 %v1053
        %1256 = vmatpush1.msra.mxu0 %v1052
        %1257 = vmatprep.subr.mxu0 %v1051
        %1258 = vmatpush1.msra.mxu0 %v1050
        %1259 = vmatprep.subr.mxu0 %v1049
        %1260 = vmatpush1.msra.mxu0 %v1048
        %1261 = vmatprep.subr.mxu0 %v1047
        %1262 = vmatpush1.msra.mxu0 %v1046
        %1263 = vmatprep.subr.mxu0 %v1045
        %1264 = vmatpush1.msra.mxu0 %v1044
        %1265 = vmatprep.subr.mxu0 %v1043
        %1266 = vmatpush1.msra.mxu0 %v1042
        %1267 = vmatprep.subr.mxu0 %v1041
        %1268 = vmatpush1.msra.mxu0 %v1040
        %1269 = vmatprep.subr.mxu0 %v1039
        %1270 = vmatpush1.msra.mxu0 %v1038
        %1271 = vmatprep.subr.mxu0 %v1037
        %1272 = vmatpush1.msra.mxu0 %v1036
        %1273 = vmatprep.subr.mxu0 %v1035
        %1274 = vmatpush1.msra.mxu0 %v1034
        %1275 = vmatprep.subr.mxu0 %v1033
        %1276 = vmatpush1.msra.mxu0 %v1032
        %1277 = vmatprep.subr.mxu0 %v1031
        %1278 = vmatpush1.msra.mxu0 %v1030
        %1279 = vmatprep.subr.mxu0 %v1093
        %1280 = vmatpush2.msra.mxu0 %v1092
        %1281 = vmatprep.subr.mxu0 %v1091
        %1282 = vmatpush2.msra.mxu0 %v1090
        %1283 = vmatprep.subr.mxu0 %v1089
        %1284 = vmatpush2.msra.mxu0 %v1088
        %1285 = vmatprep.subr.mxu0 %v1087
        %1286 = vmatpush2.msra.mxu0 %v1086
        %1287 = vmatprep.subr.mxu0 %v1085
        %1288 = vmatpush2.msra.mxu0 %v1084
        %1289 = vmatprep.subr.mxu0 %v1083
        %1290 = vmatpush2.msra.mxu0 %v1082
        %1291 = vmatprep.subr.mxu0 %v1081
        %1292 = vmatpush2.msra.mxu0 %v1080
        %1293 = vmatprep.subr.mxu0 %v1079
        %1294 = vmatpush2.msra.mxu0 %v1078
        %1295 = vmatprep.subr.mxu0 %v1077
        %1296 = vmatpush2.msra.mxu0 %v1076
        %1297 = vmatprep.subr.mxu0 %v1075
        %1298 = vmatpush2.msra.mxu0 %v1074
        %1299 = vmatprep.subr.mxu0 %v1073
        %1300 = vmatpush2.msra.mxu0 %v1072
        %1301 = vmatprep.subr.mxu0 %v1071
        %1302 = vmatpush2.msra.mxu0 %v1070
        %1303 = vmatprep.subr.mxu0 %v1069
        %1304 = vmatpush2.msra.mxu0 %v1068
        %1305 = vmatprep.subr.mxu0 %v1067
        %1306 = vmatpush2.msra.mxu0 %v1066
        %1307 = vmatprep.subr.mxu0 %v1065
        %1308 = vmatpush2.msra.mxu0 %v1064
        %1309 = vmatprep.subr.mxu0 %v1063
        %1310 = vmatpush2.msra.mxu0 %v1062
        %1311 = vmatprep.mubr.f32.mxu0 %v873
        %1312 = vmatmul.mubr.f32.gmra.mxu0 %v871
        %v1313 = vpop.f32.mrf.mxu0
        %v1314 = vadd.f32 %v1237, %v1313
        %v1315 = vpop.f32.mrf.mxu0
        %v1316 = vadd.f32 %v1239, %v1315
        %1317 = vmatprep.mubr.f32.mxu0 %v879
        %1318 = vmatmul.mubr.f32.gmra.mxu0 %v877
        %v1319 = vpop.f32.mrf.mxu0
        %v1320 = vadd.f32 %v1243, %v1319
        %v1321 = vpop.f32.mrf.mxu0
        %v1322 = vadd.f32 %v1245, %v1321
        %1323 = vdwg.mxu0
        %1324 = vmatprep.subr.mxu0 %v1125
        %1325 = vmatpush1.msra.mxu0 %v1124
        %1326 = vmatprep.subr.mxu0 %v1123
        %1327 = vmatpush1.msra.mxu0 %v1122
        %1328 = vmatprep.subr.mxu0 %v1121
        %1329 = vmatpush1.msra.mxu0 %v1120
        %1330 = vmatprep.subr.mxu0 %v1119
        %1331 = vmatpush1.msra.mxu0 %v1118
        %1332 = vmatprep.subr.mxu0 %v1117
        %1333 = vmatpush1.msra.mxu0 %v1116
        %1334 = vmatprep.subr.mxu0 %v1115
        %1335 = vmatpush1.msra.mxu0 %v1114
        %1336 = vmatprep.subr.mxu0 %v1113
        %1337 = vmatpush1.msra.mxu0 %v1112
        %1338 = vmatprep.subr.mxu0 %v1111
        %1339 = vmatpush1.msra.mxu0 %v1110
        %1340 = vmatprep.subr.mxu0 %v1109
        %1341 = vmatpush1.msra.mxu0 %v1108
        %1342 = vmatprep.subr.mxu0 %v1107
        %1343 = vmatpush1.msra.mxu0 %v1106
        %1344 = vmatprep.subr.mxu0 %v1105
        %1345 = vmatpush1.msra.mxu0 %v1104
        %1346 = vmatprep.subr.mxu0 %v1103
        %1347 = vmatpush1.msra.mxu0 %v1102
        %1348 = vmatprep.subr.mxu0 %v1101
        %1349 = vmatpush1.msra.mxu0 %v1100
        %1350 = vmatprep.subr.mxu0 %v1099
        %1351 = vmatpush1.msra.mxu0 %v1098
        %1352 = vmatprep.subr.mxu0 %v1097
        %1353 = vmatpush1.msra.mxu0 %v1096
        %1354 = vmatprep.subr.mxu0 %v1095
        %1355 = vmatpush1.msra.mxu0 %v1094
        %1356 = vmatprep.subr.mxu0 %v1157
        %1357 = vmatpush2.msra.mxu0 %v1156
        %1358 = vmatprep.subr.mxu0 %v1155
        %1359 = vmatpush2.msra.mxu0 %v1154
        %1360 = vmatprep.subr.mxu0 %v1153
        %1361 = vmatpush2.msra.mxu0 %v1152
        %1362 = vmatprep.subr.mxu0 %v1151
        %1363 = vmatpush2.msra.mxu0 %v1150
        %1364 = vmatprep.subr.mxu0 %v1149
        %1365 = vmatpush2.msra.mxu0 %v1148
        %1366 = vmatprep.subr.mxu0 %v1147
        %1367 = vmatpush2.msra.mxu0 %v1146
        %1368 = vmatprep.subr.mxu0 %v1145
        %1369 = vmatpush2.msra.mxu0 %v1144
        %1370 = vmatprep.subr.mxu0 %v1143
        %1371 = vmatpush2.msra.mxu0 %v1142
        %1372 = vmatprep.subr.mxu0 %v1141
        %1373 = vmatpush2.msra.mxu0 %v1140
        %1374 = vmatprep.subr.mxu0 %v1139
        %1375 = vmatpush2.msra.mxu0 %v1138
        %1376 = vmatprep.subr.mxu0 %v1137
        %1377 = vmatpush2.msra.mxu0 %v1136
        %1378 = vmatprep.subr.mxu0 %v1135
        %1379 = vmatpush2.msra.mxu0 %v1134
        %1380 = vmatprep.subr.mxu0 %v1133
        %1381 = vmatpush2.msra.mxu0 %v1132
        %1382 = vmatprep.subr.mxu0 %v1131
        %1383 = vmatpush2.msra.mxu0 %v1130
        %1384 = vmatprep.subr.mxu0 %v1129
        %1385 = vmatpush2.msra.mxu0 %v1128
        %1386 = vmatprep.subr.mxu0 %v1127
        %1387 = vmatpush2.msra.mxu0 %v1126
        %1388 = vmatprep.mubr.f32.mxu0 %v963
        %1389 = vmatmul.mubr.f32.gmra.mxu0 %v962
        %v1390 = vpop.f32.mrf.mxu0
        %v1391 = vadd.f32 %v1314, %v1390
        %v1392 = vpop.f32.mrf.mxu0
        %v1393 = vadd.f32 %v1316, %v1392
        %1394 = vmatprep.mubr.f32.mxu0 %v965
        %1395 = vmatmul.mubr.f32.gmra.mxu0 %v964
        %v1396 = vpop.f32.mrf.mxu0
        %v1397 = vadd.f32 %v1320, %v1396
        %v1398 = vpop.f32.mrf.mxu0
        %v1399 = vadd.f32 %v1322, %v1398
        %1400 = vdwg.mxu0
        %1401 = vst [vmem:[%s340] sm:$0xff] %v1391
        %1402 = vst [vmem:[%s340 + $0x8] sm:$0xff] %v1393
        %1403 = vst [vmem:[%s340 + $0x10] sm:$0xff] %v1397
        %1404 = vst [vmem:[%s340 + $0x18] sm:$0xff] %v1399
        %s1405 = sand.u32 %s186, 1
        %s1406 = scalar_lea.sflag [#allocation4], %s1405
        %s1407 = sand.u32 %s186, 1
        %s1408 = smul.addr %s1407, 32
        %s1409 = scalar_lea.vmem [#allocation10], %s1408
        // Predicated region
        $region65: #{tpu_custom_call.1} parent=47 // pred_check
          %p1410 = pneg %p196
        $region66: #{tpu_custom_call.1} parent=47 // pred_check_branch
          %1412 = sbr.rel (%p1410) target = $region68
        $region67: #{tpu_custom_call.1} parent=47 // pred_region
          %s1414 = ssub.s32 512, 512
          %1415 = vsyncadd %s1406, %s1414
          %s1416 = smul.addr %s26, 4
          %s1417 = smul.addr %s1416, 128
          %s1418 = scalar_lea.hbm %s7, %s1417
          %s1419 = sshll.u32 %s1409, 4
          %s1420 = int_to_ptr.vmem [resolvable:$true] %s1419
          %1425 = dma.vmem_to_hbm [thread:$0]  %s1420, 512, %s1418, %s1406, 256, 256, 16
        $region68: #{tpu_custom_call.1} parent=47 // pred_fallthru
          _
      $region48: #{tpu_custom_call.1} parent=5 // pred_fallthru
        _
      %p1426 = scmp.le.s32.totalorder 2, %s21
      // Predicated region
      $region69: #{tpu_custom_call.1} parent=5 // pred_check
        %p1427 = pneg %p1426
      $region70: #{tpu_custom_call.1} parent=5 // pred_check_branch
        %1429 = sbr.rel (%p1427) target = $region72
      $region71: #{tpu_custom_call.1} parent=5 // pred_region
        %s1430 = ssub.s32 %s21, 2
        // Predicated region
        $region73: #{tpu_custom_call.1} parent=71 // pred_check
          %p1431 = pneg %p202
        $region74: #{tpu_custom_call.1} parent=71 // pred_check_branch
          %1433 = sbr.rel (%p1431) target = $region76
        $region75: #{tpu_custom_call.1} parent=71 // pred_region
          %s1434 = sand.u32 %s187, 1
          %s1435 = scalar_lea.sflag [#allocation4], %s1434
          %s1436 = sand.u32 %s187, 1
          %s1437 = smul.addr %s1436, 32
          %s1438 = scalar_lea.vmem [#allocation10], %s1437
          %1439 = dma.done %s1435, 512
        $region76: #{tpu_custom_call.1} parent=71 // pred_fallthru
          _
      $region72: #{tpu_custom_call.1} parent=5 // pred_fallthru
        _
    $region6: #{tpu_custom_call.1} parent=1 // loop_footer
      %s25 = sadd.s32 1, %s21
    $region7: #{tpu_custom_call.1} parent=1 // loop_footer_branch
      %20 = sbr.rel target = $region3
    $region8: #{tpu_custom_call.1} parent=1 // loop_exit
      _
    %1440 = vsyncpa [#allocation3], 1
    %s1441 = scalar_lea.sflag [#allocation3], 1
    %1442 = vsyncpa %s1441, 1
    %1443 = vsyncpa [#allocation6], 1
    %1444 = vsyncpa [#allocation9], 1
    %1445 = vsyncpa [#allocation4], 1
    %s1446 = scalar_lea.sflag [#allocation4], 1
    %1447 = vsyncpa %s1446, 1

</llo_original>
